<compile_context>
chip_gen: v7x
topology: tpu7x:2x2x1
jax: 0.10.0
libtpu: 0.0.40
codegen_flags: <defaults>
</compile_context>

<pallas_src>
import math
from functools import partial

import jax
import jax.numpy as jnp
from jax.experimental import pallas as pl
from jax.experimental.pallas import tpu as pltpu

LANE = 128      # vreg lane width
SUBLANE = 8     # vreg sublane width (f32)
MAX_B_TILE = 256  # batch tile ceiling (fits easily in 32 MiB scoped VMEM on v7x)

_HIGHEST = jax.lax.Precision.HIGHEST


def _round_up(n, m):
    return ((n + m - 1) // m) * m


# ----------------------------------------------------------------------------
# Kernel: sequence-fused RNN.  grid = (batch_tiles, T); weights resident in
# VMEM (constant index_maps); hidden state carried in VMEM scratch.
# ----------------------------------------------------------------------------
def _rnn_seq_kernel(x_ref, h0_ref, wxh_ref, whh_ref, bxh_ref, who_ref, bho_ref,
                    out_ref, h_fin_ref, h_scr):
    t = pl.program_id(1)

    @pl.when(t == 0)
    def _():
        # Load the initial hidden state for this batch tile into the carry.
        h_scr[...] = h0_ref[...]

    h_prev = h_scr[...]
    # Two MXU dots accumulating into one f32 pre-activation (no [x|h] concat).
    pre = (jnp.dot(x_ref[0], wxh_ref[...],
                   preferred_element_type=jnp.float32, precision=_HIGHEST)
           + jnp.dot(h_prev, whh_ref[...],
                     preferred_element_type=jnp.float32, precision=_HIGHEST)
           + bxh_ref[...])
    h_new = jnp.tanh(pre)                      # EUP slot; keep off the VPU
    h_scr[...] = h_new                         # carry to next timestep (VMEM only)

    out_ref[0] = (jnp.dot(h_new, who_ref[...],
                          preferred_element_type=jnp.float32, precision=_HIGHEST)
                  + bho_ref[...]).astype(out_ref.dtype)

    @pl.when(t == pl.num_programs(1) - 1)
    def _():
        h_fin_ref[...] = h_new.astype(h_fin_ref.dtype)


# ----------------------------------------------------------------------------
# One-time parameter preparation (transpose + lane padding).
# ----------------------------------------------------------------------------
def prepare_params(params):
    hidden_size, input_size = params["Wxh"].shape
    output_size = params["Who"].shape[0]

    i_pad = _round_up(input_size, LANE)
    h_pad = _round_up(hidden_size, LANE)
    o_pad = _round_up(output_size, LANE)

    wxh = jnp.zeros((i_pad, h_pad), jnp.float32)
    wxh = wxh.at[:input_size, :hidden_size].set(params["Wxh"].T)

    whh = jnp.zeros((h_pad, h_pad), jnp.float32)
    whh = whh.at[:hidden_size, :hidden_size].set(params["Whh"].T)

    bxh = jnp.zeros((1, h_pad), jnp.float32).at[0, :hidden_size].set(params["b_xh"])

    who = jnp.zeros((h_pad, o_pad), jnp.float32)
    who = who.at[:hidden_size, :output_size].set(params["Who"].T)

    bho = jnp.zeros((1, o_pad), jnp.float32).at[0, :output_size].set(params["b_ho"])

    return {"wxh": wxh, "whh": whh, "bxh": bxh, "who": who, "bho": bho}


# ----------------------------------------------------------------------------
# Forward wrappers (jitted): pad, run one pallas_call over the whole sequence,
# slice logical shapes back out.
# ----------------------------------------------------------------------------
@partial(jax.jit, static_argnames=("input_size", "hidden_size", "output_size"))
def rnn_forward_sequence(xs, hidden, wxh, whh, bxh, who, bho,
                         *, input_size, hidden_size, output_size):
    """xs: (T, batch, input_size), hidden: (batch, hidden_size).
    Returns (outputs (T, batch, output_size), final hidden (batch, hidden_size))."""
    T, batch, _ = xs.shape
    i_pad, h_pad = wxh.shape
    o_pad = who.shape[1]

    b_pad = _round_up(batch, SUBLANE)
    b_tile = b_pad if b_pad <= MAX_B_TILE else MAX_B_TILE
    b_pad = _round_up(b_pad, b_tile)
    nb = b_pad // b_tile

    xs_p = jnp.zeros((T, b_pad, i_pad), jnp.float32)
    xs_p = xs_p.at[:, :batch, :input_size].set(xs.astype(jnp.float32))
    h0_p = jnp.zeros((b_pad, h_pad), jnp.float32)
    h0_p = h0_p.at[:batch, :hidden_size].set(hidden.astype(jnp.float32))

    flops = int(2 * T * b_pad * h_pad * (i_pad + h_pad + o_pad))
    transcendentals = int(T * b_pad * h_pad)
    bytes_accessed = 4 * int(xs_p.size + 2 * h0_p.size + wxh.size + whh.size
                             + bxh.size + who.size + bho.size + T * b_pad * o_pad)

    grid_spec = pltpu.PrefetchScalarGridSpec(
        num_scalar_prefetch=0,
        grid=(nb, T),
        in_specs=[
            pl.BlockSpec((1, b_tile, i_pad), lambda b, t: (t, b, 0)),   # x_t
            pl.BlockSpec((b_tile, h_pad),    lambda b, t: (b, 0)),      # h0
            pl.BlockSpec((i_pad, h_pad),     lambda b, t: (0, 0)),      # Wxh^T (resident)
            pl.BlockSpec((h_pad, h_pad),     lambda b, t: (0, 0)),      # Whh^T (resident)
            pl.BlockSpec((1, h_pad),         lambda b, t: (0, 0)),      # b_xh  (resident)
            pl.BlockSpec((h_pad, o_pad),     lambda b, t: (0, 0)),      # Who^T (resident)
            pl.BlockSpec((1, o_pad),         lambda b, t: (0, 0)),      # b_ho  (resident)
        ],
        out_specs=(
            pl.BlockSpec((1, b_tile, o_pad), lambda b, t: (t, b, 0)),   # outputs
            pl.BlockSpec((b_tile, h_pad),    lambda b, t: (b, 0)),      # final hidden
        ),
        scratch_shapes=[pltpu.VMEM((b_tile, h_pad), jnp.float32)],      # hidden carry
    )

    out_p, h_fin_p = pl.pallas_call(
        _rnn_seq_kernel,
        out_shape=(
            jax.ShapeDtypeStruct((T, b_pad, o_pad), jnp.float32),
            jax.ShapeDtypeStruct((b_pad, h_pad), jnp.float32),
        ),
        grid_spec=grid_spec,
        input_output_aliases={1: 1},   # h0 buffer reused for the final hidden
        compiler_params=pltpu.CompilerParams(
            dimension_semantics=("parallel", "arbitrary")),
        cost_estimate=pl.CostEstimate(flops=flops,
                                      transcendentals=transcendentals,
                                      bytes_accessed=bytes_accessed),
    )(xs_p, h0_p, wxh, whh, bxh, who, bho)

    return (out_p[:, :batch, :output_size],
            h_fin_p[:batch, :hidden_size])


def rnn_cell_forward(x, hidden, prep, *, input_size, hidden_size, output_size):
    """Single timestep — exactly the PyTorch module's forward(x, hidden)."""
    outs, h_new = rnn_forward_sequence(
        x[None], hidden, prep["wxh"], prep["whh"], prep["bxh"], prep["who"],
        prep["bho"], input_size=input_size, hidden_size=hidden_size,
        output_size=output_size)
    return outs[0], h_new


# ----------------------------------------------------------------------------
# Init + pure-JAX reference (mirrors the PyTorch module).
# ----------------------------------------------------------------------------
def init_params(key, input_size, hidden_size, output_size):
    k = jax.random.split(key, 5)

    def uni(kk, shape, fan_in):
        bound = 1.0 / math.sqrt(fan_in)
        return jax.random.uniform(kk, shape, jnp.float32, -bound, bound)

    return {
        "Wxh": uni(k[0], (hidden_size, input_size), input_size),
        "b_xh": uni(k[1], (hidden_size,), input_size),
        "Whh": uni(k[2], (hidden_size, hidden_size), hidden_size),  # bias=False
        "Who": uni(k[3], (output_size, hidden_size), hidden_size),
        "b_ho": uni(k[4], (output_size,), hidden_size),
    }


def init_hidden(batch_size, hidden_size):
    return jnp.zeros((batch_size, hidden_size), jnp.float32)


def reference_forward(x, hidden, params):
    mm = partial(jnp.dot, precision=_HIGHEST)
    h_new = jnp.tanh(mm(x, params["Wxh"].T) + params["b_xh"]
                     + mm(hidden, params["Whh"].T))
    out = mm(h_new, params["Who"].T) + params["b_ho"]
    return out, h_new


if __name__ == "__main__":
    batch_size = 3
    input_size = 10
    hidden_size = 20
    output_size = 5
    seq_len = 8

    key = jax.random.PRNGKey(0)
    kp, kx, kh, ks = jax.random.split(key, 4)

    params = init_params(kp, input_size, hidden_size, output_size)
    prep = prepare_params(params)   # one-time transpose/pad (hoisted)

    # ---- single step: exactly the module's forward(x, hidden) ----
    x = jax.random.normal(kx, (batch_size, input_size), jnp.float32)
    hidden = init_hidden(batch_size, hidden_size)
    hidden = hidden + 0.1 * jax.random.normal(kh, hidden.shape, jnp.float32)

    out, h_new = rnn_cell_forward(x, hidden, prep, input_size=input_size,
                                  hidden_size=hidden_size, output_size=output_size)
    out, h_new = jax.block_until_ready((out, h_new))

    ref_out, ref_h = reference_forward(x, hidden, params)
    assert out.shape == (batch_size, output_size)
    assert h_new.shape == (batch_size, hidden_size)
    assert jnp.allclose(out, ref_out, atol=1e-4), "single-step output mismatch"
    assert jnp.allclose(h_new, ref_h, atol=1e-4), "single-step hidden mismatch"

    # ---- multi-step sequence fused into one pallas_call (grid=(B_tiles, T)) ----
    xs = jax.random.normal(ks, (seq_len, batch_size, input_size), jnp.float32)
    h0 = init_hidden(batch_size, hidden_size)
    outs, h_T = rnn_forward_sequence(
        xs, h0, prep["wxh"], prep["whh"], prep["bxh"], prep["who"], prep["bho"],
        input_size=input_size, hidden_size=hidden_size, output_size=output_size)
    outs, h_T = jax.block_until_ready((outs, h_T))

    h_ref = h0
    ref_outs = []
    for t in range(seq_len):
        o_t, h_ref = reference_forward(xs[t], h_ref, params)
        ref_outs.append(o_t)
    ref_outs = jnp.stack(ref_outs)

    assert outs.shape == (seq_len, batch_size, output_size)
    assert h_T.shape == (batch_size, hidden_size)
    assert jnp.allclose(outs, ref_outs, atol=1e-4), "sequence outputs mismatch"
    assert jnp.allclose(h_T, h_ref, atol=1e-4), "sequence final hidden mismatch"

    print("KERNEL_OK")
</pallas_src>

<mosaic_0001>
module attributes {stable_mosaic.version = 11 : i64} {
  func.func @_rnn_seq_kernel(%arg0: i32, %arg1: i32, %arg2: memref<1x8x128xf32, #tpu.memory_space<vmem>>, %arg3: memref<8x128xf32, #tpu.memory_space<vmem>>, %arg4: memref<128x128xf32, #tpu.memory_space<vmem>>, %arg5: memref<128x128xf32, #tpu.memory_space<vmem>>, %arg6: memref<1x128xf32, #tpu.memory_space<vmem>>, %arg7: memref<128x128xf32, #tpu.memory_space<vmem>>, %arg8: memref<1x128xf32, #tpu.memory_space<vmem>>, %arg9: memref<1x8x128xf32, #tpu.memory_space<vmem>>, %arg10: memref<8x128xf32, #tpu.memory_space<vmem>>, %arg11: memref<8x128xf32, #tpu.memory_space<vmem>>) attributes {dimension_semantics = [#tpu.dimension_semantics<parallel>, #tpu.dimension_semantics<arbitrary>], iteration_bounds = array<i64: 1, 1>, scalar_prefetch = 0 : i64, scratch_operands = 1 : i64, tpu.core_type = #tpu.core_type<tc>, window_params = [{transform_indices = @transform_0, window_bounds = array<i64: 1, 8, 128>}, {transform_indices = @transform_1, window_bounds = array<i64: 8, 128>}, {pipeline_mode = #tpu.pipeline_mode<synchronous>, transform_indices = @transform_2, window_bounds = array<i64: 128, 128>}, {pipeline_mode = #tpu.pipeline_mode<synchronous>, transform_indices = @transform_3, window_bounds = array<i64: 128, 128>}, {pipeline_mode = #tpu.pipeline_mode<synchronous>, transform_indices = @transform_4, window_bounds = array<i64: 1, 128>}, {pipeline_mode = #tpu.pipeline_mode<synchronous>, transform_indices = @transform_5, window_bounds = array<i64: 128, 128>}, {pipeline_mode = #tpu.pipeline_mode<synchronous>, transform_indices = @transform_6, window_bounds = array<i64: 1, 128>}, {transform_indices = @transform_7, window_bounds = array<i64: 1, 8, 128>}, {transform_indices = @transform_8, window_bounds = array<i64: 8, 128>}]} {
    %c0_i32 = arith.constant 0 : i32
    %0 = arith.cmpi eq, %arg1, %c0_i32 : i32
    %1 = arith.extui %0 : i1 to i32
    %c0_i32_0 = arith.constant 0 : i32
    %2 = arith.cmpi ne, %1, %c0_i32_0 : i32
    scf.if %2 {
      %c0_24 = arith.constant 0 : index
      %c0_25 = arith.constant 0 : index
      %27 = vector.load %arg3[%c0_24, %c0_25] : memref<8x128xf32, #tpu.memory_space<vmem>>, vector<8x128xf32>
      %c0_26 = arith.constant 0 : index
      %c0_27 = arith.constant 0 : index
      %28 = vector.load %arg11[%c0_26, %c0_27] : memref<8x128xf32, #tpu.memory_space<vmem>>, vector<8x128xf32>
      tpu.vector_store %arg11[%c0_26, %c0_27], %27 {strides = array<i32>} : memref<8x128xf32, #tpu.memory_space<vmem>>, vector<8x128xf32>,
    } else {
    }
    %c0 = arith.constant 0 : index
    %c0_1 = arith.constant 0 : index
    %3 = vector.load %arg11[%c0, %c0_1] : memref<8x128xf32, #tpu.memory_space<vmem>>, vector<8x128xf32>
    %c0_2 = arith.constant 0 : index
    %c0_3 = arith.constant 0 : index
    %c0_4 = arith.constant 0 : index
    %4 = vector.load %arg2[%c0_2, %c0_3, %c0_4] : memref<1x8x128xf32, #tpu.memory_space<vmem>>, vector<1x8x128xf32>
    %5 = vector.shape_cast %4 : vector<1x8x128xf32> to vector<8x128xf32>
    %c0_5 = arith.constant 0 : index
    %c0_6 = arith.constant 0 : index
    %6 = vector.load %arg4[%c0_5, %c0_6] : memref<128x128xf32, #tpu.memory_space<vmem>>, vector<128x128xf32>
    %cst = arith.constant dense<0.000000e+00> : vector<8x128xf32>
    %7 = tpu.matmul %5, %6, %cst {dimension_numbers = #tpu.dot_dimension_numbers<[1], [0], [0], [1], [0, 0, 1, 1], [], []>, precision = #tpu.contract_precision<fp32>} : vector<8x128xf32>, vector<128x128xf32>, vector<8x128xf32> -> vector<8x128xf32>
    %c0_7 = arith.constant 0 : index
    %c0_8 = arith.constant 0 : index
    %8 = vector.load %arg5[%c0_7, %c0_8] : memref<128x128xf32, #tpu.memory_space<vmem>>, vector<128x128xf32>
    %cst_9 = arith.constant dense<0.000000e+00> : vector<8x128xf32>
    %9 = tpu.matmul %3, %8, %cst_9 {dimension_numbers = #tpu.dot_dimension_numbers<[1], [0], [0], [1], [0, 0, 1, 1], [], []>, precision = #tpu.contract_precision<fp32>} : vector<8x128xf32>, vector<128x128xf32>, vector<8x128xf32> -> vector<8x128xf32>
    %10 = arith.addf %7, %9 : vector<8x128xf32>
    %c0_10 = arith.constant 0 : index
    %c0_11 = arith.constant 0 : index
    %11 = vector.load %arg6[%c0_10, %c0_11] : memref<1x128xf32, #tpu.memory_space<vmem>>, vector<1x128xf32>
    %12 = vector.broadcast %11 : vector<1x128xf32> to vector<8x128xf32>
    %13 = arith.addf %10, %12 : vector<8x128xf32>
    %14 = math.tanh %13 : vector<8x128xf32>
    %c0_12 = arith.constant 0 : index
    %c0_13 = arith.constant 0 : index
    %15 = vector.load %arg11[%c0_12, %c0_13] : memref<8x128xf32, #tpu.memory_space<vmem>>, vector<8x128xf32>
    tpu.vector_store %arg11[%c0_12, %c0_13], %14 {strides = array<i32>} : memref<8x128xf32, #tpu.memory_space<vmem>>, vector<8x128xf32>,
    %c0_14 = arith.constant 0 : index
    %c0_15 = arith.constant 0 : index
    %16 = vector.load %arg7[%c0_14, %c0_15] : memref<128x128xf32, #tpu.memory_space<vmem>>, vector<128x128xf32>
    %cst_16 = arith.constant dense<0.000000e+00> : vector<8x128xf32>
    %17 = tpu.matmul %14, %16, %cst_16 {dimension_numbers = #tpu.dot_dimension_numbers<[1], [0], [0], [1], [0, 0, 1, 1], [], []>, precision = #tpu.contract_precision<fp32>} : vector<8x128xf32>, vector<128x128xf32>, vector<8x128xf32> -> vector<8x128xf32>
    %c0_17 = arith.constant 0 : index
    %c0_18 = arith.constant 0 : index
    %18 = vector.load %arg8[%c0_17, %c0_18] : memref<1x128xf32, #tpu.memory_space<vmem>>, vector<1x128xf32>
    %19 = vector.broadcast %18 : vector<1x128xf32> to vector<8x128xf32>
    %20 = arith.addf %17, %19 : vector<8x128xf32>
    %c0_19 = arith.constant 0 : index
    %c0_20 = arith.constant 0 : index
    %c0_21 = arith.constant 0 : index
    %21 = vector.load %arg9[%c0_19, %c0_20, %c0_21] : memref<1x8x128xf32, #tpu.memory_space<vmem>>, vector<1x8x128xf32>
    %22 = vector.shape_cast %21 : vector<1x8x128xf32> to vector<8x128xf32>
    %23 = vector.shape_cast %20 : vector<8x128xf32> to vector<1x8x128xf32>
    tpu.vector_store %arg9[%c0_19, %c0_20, %c0_21], %23 {strides = array<i32>} : memref<1x8x128xf32, #tpu.memory_space<vmem>>, vector<1x8x128xf32>,
    %c0_i32_22 = arith.constant 0 : i32
    %24 = arith.cmpi eq, %arg1, %c0_i32_22 : i32
    %25 = arith.extui %24 : i1 to i32
    %c0_i32_23 = arith.constant 0 : i32
    %26 = arith.cmpi ne, %25, %c0_i32_23 : i32
    scf.if %26 {
      %c0_24 = arith.constant 0 : index
      %c0_25 = arith.constant 0 : index
      %27 = vector.load %arg10[%c0_24, %c0_25] : memref<8x128xf32, #tpu.memory_space<vmem>>, vector<8x128xf32>
      tpu.vector_store %arg10[%c0_24, %c0_25], %14 {strides = array<i32>} : memref<8x128xf32, #tpu.memory_space<vmem>>, vector<8x128xf32>,
    } else {
    }
    return
  }
  func.func @transform_0(%arg0: i32, %arg1: i32) -> (i32, i32, i32) {
    %c0_i32 = arith.constant 0 : i32
    %c0_i32_0 = arith.constant 0 : i32
    return %arg1, %arg0, %c0_i32 : i32, i32, i32
  }
  func.func @transform_1(%arg0: i32, %arg1: i32) -> (i32, i32) {
    %c0_i32 = arith.constant 0 : i32
    %c0_i32_0 = arith.constant 0 : i32
    return %arg0, %c0_i32 : i32, i32
  }
  func.func @transform_2(%arg0: i32, %arg1: i32) -> (i32, i32) {
    %c0_i32 = arith.constant 0 : i32
    %c0_i32_0 = arith.constant 0 : i32
    %c0_i32_1 = arith.constant 0 : i32
    return %c0_i32, %c0_i32_0 : i32, i32
  }
  func.func @transform_3(%arg0: i32, %arg1: i32) -> (i32, i32) {
    %c0_i32 = arith.constant 0 : i32
    %c0_i32_0 = arith.constant 0 : i32
    %c0_i32_1 = arith.constant 0 : i32
    return %c0_i32, %c0_i32_0 : i32, i32
  }
  func.func @transform_4(%arg0: i32, %arg1: i32) -> (i32, i32) {
    %c0_i32 = arith.constant 0 : i32
    %c0_i32_0 = arith.constant 0 : i32
    %c0_i32_1 = arith.constant 0 : i32
    return %c0_i32, %c0_i32_0 : i32, i32
  }
  func.func @transform_5(%arg0: i32, %arg1: i32) -> (i32, i32) {
    %c0_i32 = arith.constant 0 : i32
    %c0_i32_0 = arith.constant 0 : i32
    %c0_i32_1 = arith.constant 0 : i32
    return %c0_i32, %c0_i32_0 : i32, i32
  }
  func.func @transform_6(%arg0: i32, %arg1: i32) -> (i32, i32) {
    %c0_i32 = arith.constant 0 : i32
    %c0_i32_0 = arith.constant 0 : i32
    %c0_i32_1 = arith.constant 0 : i32
    return %c0_i32, %c0_i32_0 : i32, i32
  }
  func.func @transform_7(%arg0: i32, %arg1: i32) -> (i32, i32, i32) {
    %c0_i32 = arith.constant 0 : i32
    %c0_i32_0 = arith.constant 0 : i32
    return %arg1, %arg0, %c0_i32 : i32, i32, i32
  }
  func.func @transform_8(%arg0: i32, %arg1: i32) -> (i32, i32) {
    %c0_i32 = arith.constant 0 : i32
    %c0_i32_0 = arith.constant 0 : i32
    return %arg0, %c0_i32 : i32, i32
  }
}

</mosaic_0001>

<llo_original>
// kernel: rnn_forward_sequence.1
$region0: #{rnn_forward_sequence.1}
  #allocation0 [shape = 'u32[]', space=smem, size = 0x4, offset = 0x4, fixed_abs, tag = 'smem constant byte address 0x4 - core index']
  #allocation1 [shape = 'u32[144,128]{1,0:T(1,128)}', space=vmem, size = 0x12000, scoped, tag = 'internal scratch']
  #allocation2 [shape = 'f32[8,128]{1,0:T(8,128)}', space=vmem, size = 0x1000, scoped, tag = 'scratch operand']
  %s0 = inlined_call_operand.vmem [shape: f32[1,8,128], index: 0, kind: input, shape index: {}]
  %s1 = inlined_call_operand.vmem [shape: f32[8,128], index: 1, kind: input, shape index: {}, may-alias: {1,8}]
  %s2 = inlined_call_operand.hbm [shape: f32[128,128], index: 2, kind: input, shape index: {}]
  %s3 = inlined_call_operand.hbm [shape: f32[128,128], index: 3, kind: input, shape index: {}]
  %s4 = inlined_call_operand.vmem [shape: f32[1,128], index: 4, kind: input, shape index: {}]
  %s5 = inlined_call_operand.hbm [shape: f32[128,128], index: 5, kind: input, shape index: {}]
  %s6 = inlined_call_operand.vmem [shape: f32[1,128], index: 6, kind: input, shape index: {}]
  %s7 = inlined_call_operand.vmem [shape: f32[1,8,128], index: 7, kind: output, shape index: {0}]
  %s8 = inlined_call_operand.vmem [shape: f32[8,128], index: 8, kind: output, shape index: {1}, may-alias: {1,8}]
  %9 = xla_tuple %s7, %s8
  %s10 = sld [smem:[#allocation0]]
  $region66: #{rnn_forward_sequence.1} parent=0
    _
  %s12 = ssub.s32 1, %s10
  %s13 = scalar_select 0, %s12, %s10
  $region1: #{rnn_forward_sequence.1} parent=0
    #allocation3 [shape = 'u8[65536]{0}', space=vmem, size = 0x10000, scoped, tag = 'input window, operand 2, single buffered']
    #allocation4 [shape = 's32[1]{0}', space=sflag, size = 0x4, scoped, tag = 'scoped memory for rnn_forward_sequence.1']
    #allocation5 [shape = 'u8[65536]{0}', space=vmem, size = 0x10000, scoped, tag = 'input window, operand 3, single buffered']
    #allocation6 [shape = 's32[1]{0}', space=sflag, size = 0x4, scoped, tag = 'scoped memory for rnn_forward_sequence.1']
    #allocation7 [shape = 'u8[65536]{0}', space=vmem, size = 0x10000, scoped, tag = 'input window, operand 5, single buffered']
    %14 = vsyncpa [#allocation4], 0
    %15 = vsyncpa [#allocation6], 0
    // Predicated region
    $region2: #{rnn_forward_sequence.1} parent=1 // pred_check
      _
    $region3: #{rnn_forward_sequence.1} parent=1 // pred_check_branch
      %17 = sbr.rel (0) target = $region5
    $region4: #{rnn_forward_sequence.1} parent=1 // pred_region
      _
    $region5: #{rnn_forward_sequence.1} parent=1 // pred_fallthru
      _
    // Predicated region
    $region6: #{rnn_forward_sequence.1} parent=1 // pred_check
      _
    $region7: #{rnn_forward_sequence.1} parent=1 // pred_check_branch
      %19 = sbr.rel (0) target = $region9
    $region8: #{rnn_forward_sequence.1} parent=1 // pred_region
      _
    $region9: #{rnn_forward_sequence.1} parent=1 // pred_fallthru
      _
    // Predicated region
    $region10: #{rnn_forward_sequence.1} parent=1 // pred_check
      _
    $region11: #{rnn_forward_sequence.1} parent=1 // pred_check_branch
      %21 = sbr.rel (0) target = $region13
    $region12: #{rnn_forward_sequence.1} parent=1 // pred_region
      %s23 = ssub.s32 2048, 2048
      %24 = vsyncadd [#allocation4], %s23
      %s25 = sshll.u32 [#allocation3], 4
      %s26 = int_to_ptr.vmem [resolvable:$true] %s25
      %31 = dma.hbm_to_vmem [thread:$0]  %s2, 2048, %s26, [#allocation4], 128, 128, 8
    $region13: #{rnn_forward_sequence.1} parent=1 // pred_fallthru
      _
    // Predicated region
    $region14: #{rnn_forward_sequence.1} parent=1 // pred_check
      _
    $region15: #{rnn_forward_sequence.1} parent=1 // pred_check_branch
      %33 = sbr.rel (0) target = $region17
    $region16: #{rnn_forward_sequence.1} parent=1 // pred_region
      %s35 = ssub.s32 2048, 2048
      %36 = vsyncadd [#allocation6], %s35
      %s37 = sshll.u32 [#allocation5], 4
      %s38 = int_to_ptr.vmem [resolvable:$true] %s37
      %43 = dma.hbm_to_vmem [thread:$0]  %s3, 2048, %s38, [#allocation6], 128, 128, 8
    $region17: #{rnn_forward_sequence.1} parent=1 // pred_fallthru
      _
    // Predicated region
    $region18: #{rnn_forward_sequence.1} parent=1 // pred_check
      _
    $region19: #{rnn_forward_sequence.1} parent=1 // pred_check_branch
      %45 = sbr.rel (0) target = $region21
    $region20: #{rnn_forward_sequence.1} parent=1 // pred_region
      _
    $region21: #{rnn_forward_sequence.1} parent=1 // pred_fallthru
      _
    // Predicated region
    $region22: #{rnn_forward_sequence.1} parent=1 // pred_check
      _
    $region23: #{rnn_forward_sequence.1} parent=1 // pred_check_branch
      %47 = sbr.rel (0) target = $region25
    $region24: #{rnn_forward_sequence.1} parent=1 // pred_region
      %s49 = ssub.s32 2048, 2048
      %50 = vsyncadd [#allocation6], %s49
      %s51 = sshll.u32 [#allocation7], 4
      %s52 = int_to_ptr.vmem [resolvable:$true] %s51
      %57 = dma.hbm_to_vmem [thread:$0]  %s5, 2048, %s52, [#allocation6], 128, 128, 8
    $region25: #{rnn_forward_sequence.1} parent=1 // pred_fallthru
      _
    // Predicated region
    $region26: #{rnn_forward_sequence.1} parent=1 // pred_check
      _
    $region27: #{rnn_forward_sequence.1} parent=1 // pred_check_branch
      %59 = sbr.rel (0) target = $region29
    $region28: #{rnn_forward_sequence.1} parent=1 // pred_region
      _
    $region29: #{rnn_forward_sequence.1} parent=1 // pred_fallthru
      _
    // Predicated region
    $region30: #{rnn_forward_sequence.1} parent=1 // pred_check
      _
    $region31: #{rnn_forward_sequence.1} parent=1 // pred_check_branch
      %61 = sbr.rel (0) target = $region33
    $region32: #{rnn_forward_sequence.1} parent=1 // pred_region
      %62 = dma.done [#allocation4], 2048
    $region33: #{rnn_forward_sequence.1} parent=1 // pred_fallthru
      _
    // Predicated region
    $region34: #{rnn_forward_sequence.1} parent=1 // pred_check
      _
    $region35: #{rnn_forward_sequence.1} parent=1 // pred_check_branch
      %64 = sbr.rel (0) target = $region37
    $region36: #{rnn_forward_sequence.1} parent=1 // pred_region
      %65 = dma.done [#allocation6], 2048
    $region37: #{rnn_forward_sequence.1} parent=1 // pred_fallthru
      _
    // Predicated region
    $region38: #{rnn_forward_sequence.1} parent=1 // pred_check
      _
    $region39: #{rnn_forward_sequence.1} parent=1 // pred_check_branch
      %67 = sbr.rel (0) target = $region41
    $region40: #{rnn_forward_sequence.1} parent=1 // pred_region
      %68 = dma.done [#allocation6], 2048
    $region41: #{rnn_forward_sequence.1} parent=1 // pred_fallthru
      _
    %p69 = scmp.eq.s32.totalorder 0, 0
    // Predicated region
    $region42: #{rnn_forward_sequence.1} parent=1 // pred_check
      %p70 = pneg %p69
    $region43: #{rnn_forward_sequence.1} parent=1 // pred_check_branch
      %72 = sbr.rel (%p70) target = $region45
    $region44: #{rnn_forward_sequence.1} parent=1 // pred_region
      %v73 = vld [vmem:[%s1] sm:$0xff]
      %74 = vst [vmem:[#allocation2] sm:$0xff] %v73
    $region45: #{rnn_forward_sequence.1} parent=1 // pred_fallthru
      _
    %v75 = vld [vmem:[#allocation2] sm:$0xff]
    %v76 = vld [vmem:[%s0] sm:$0xff]
    %v77 = vld [vmem:[#allocation3] sm:$0xff]
    %v78 = vld [vmem:[#allocation3 + $0x8] sm:$0xff]
    %v79 = vld [vmem:[#allocation3 + $0x10] sm:$0xff]
    %v80 = vld [vmem:[#allocation3 + $0x18] sm:$0xff]
    %v81 = vld [vmem:[#allocation3 + $0x20] sm:$0xff]
    %v82 = vld [vmem:[#allocation3 + $0x28] sm:$0xff]
    %v83 = vld [vmem:[#allocation3 + $0x30] sm:$0xff]
    %v84 = vld [vmem:[#allocation3 + $0x38] sm:$0xff]
    %v85 = vld [vmem:[#allocation3 + $0x40] sm:$0xff]
    %v86 = vld [vmem:[#allocation3 + $0x48] sm:$0xff]
    %v87 = vld [vmem:[#allocation3 + $0x50] sm:$0xff]
    %v88 = vld [vmem:[#allocation3 + $0x58] sm:$0xff]
    %v89 = vld [vmem:[#allocation3 + $0x60] sm:$0xff]
    %v90 = vld [vmem:[#allocation3 + $0x68] sm:$0xff]
    %v91 = vld [vmem:[#allocation3 + $0x70] sm:$0xff]
    %v92 = vld [vmem:[#allocation3 + $0x78] sm:$0xff]
    %v93 = vld [vmem:[#allocation5] sm:$0xff]
    %v94 = vld [vmem:[#allocation5 + $0x8] sm:$0xff]
    %v95 = vld [vmem:[#allocation5 + $0x10] sm:$0xff]
    %v96 = vld [vmem:[#allocation5 + $0x18] sm:$0xff]
    %v97 = vld [vmem:[#allocation5 + $0x20] sm:$0xff]
    %v98 = vld [vmem:[#allocation5 + $0x28] sm:$0xff]
    %v99 = vld [vmem:[#allocation5 + $0x30] sm:$0xff]
    %v100 = vld [vmem:[#allocation5 + $0x38] sm:$0xff]
    %v101 = vld [vmem:[#allocation5 + $0x40] sm:$0xff]
    %v102 = vld [vmem:[#allocation5 + $0x48] sm:$0xff]
    %v103 = vld [vmem:[#allocation5 + $0x50] sm:$0xff]
    %v104 = vld [vmem:[#allocation5 + $0x58] sm:$0xff]
    %v105 = vld [vmem:[#allocation5 + $0x60] sm:$0xff]
    %v106 = vld [vmem:[#allocation5 + $0x68] sm:$0xff]
    %v107 = vld [vmem:[#allocation5 + $0x70] sm:$0xff]
    %v108 = vld [vmem:[#allocation5 + $0x78] sm:$0xff]
    %109 = vmatprep.subr.mxu0 0.0
    %v110 = vand.u32 %v93, 4294901760
    %111 = vmatpush1.msra.mxu0 %v110
    %112 = vmatprep.subr.mxu0 0.0
    %v113 = vand.u32 %v94, 4294901760
    %114 = vmatpush1.msra.mxu0 %v113
    %115 = vmatprep.subr.mxu0 0.0
    %v116 = vand.u32 %v95, 4294901760
    %117 = vmatpush1.msra.mxu0 %v116
    %118 = vmatprep.subr.mxu0 0.0
    %v119 = vand.u32 %v96, 4294901760
    %120 = vmatpush1.msra.mxu0 %v119
    %121 = vmatprep.subr.mxu0 0.0
    %v122 = vand.u32 %v97, 4294901760
    %123 = vmatpush1.msra.mxu0 %v122
    %124 = vmatprep.subr.mxu0 0.0
    %v125 = vand.u32 %v98, 4294901760
    %126 = vmatpush1.msra.mxu0 %v125
    %127 = vmatprep.subr.mxu0 0.0
    %v128 = vand.u32 %v99, 4294901760
    %129 = vmatpush1.msra.mxu0 %v128
    %130 = vmatprep.subr.mxu0 0.0
    %v131 = vand.u32 %v100, 4294901760
    %132 = vmatpush1.msra.mxu0 %v131
    %133 = vmatprep.subr.mxu0 0.0
    %v134 = vand.u32 %v101, 4294901760
    %135 = vmatpush1.msra.mxu0 %v134
    %136 = vmatprep.subr.mxu0 0.0
    %v137 = vand.u32 %v102, 4294901760
    %138 = vmatpush1.msra.mxu0 %v137
    %139 = vmatprep.subr.mxu0 0.0
    %v140 = vand.u32 %v103, 4294901760
    %141 = vmatpush1.msra.mxu0 %v140
    %142 = vmatprep.subr.mxu0 0.0
    %v143 = vand.u32 %v104, 4294901760
    %144 = vmatpush1.msra.mxu0 %v143
    %145 = vmatprep.subr.mxu0 0.0
    %v146 = vand.u32 %v105, 4294901760
    %147 = vmatpush1.msra.mxu0 %v146
    %148 = vmatprep.subr.mxu0 0.0
    %v149 = vand.u32 %v106, 4294901760
    %150 = vmatpush1.msra.mxu0 %v149
    %151 = vmatprep.subr.mxu0 0.0
    %v152 = vand.u32 %v107, 4294901760
    %153 = vmatpush1.msra.mxu0 %v152
    %154 = vmatprep.subr.mxu0 0.0
    %v155 = vand.u32 %v108, 4294901760
    %156 = vmatpush1.msra.mxu0 %v155
    %157 = vmatprep.subr.mxu0 0.0
    %158 = vmatpush1.msra.mxu0 0.0
    %159 = vmatprep.subr.mxu0 0.0
    %160 = vmatpush1.msra.mxu0 0.0
    %161 = vmatprep.subr.mxu0 0.0
    %162 = vmatpush1.msra.mxu0 0.0
    %163 = vmatprep.subr.mxu0 0.0
    %164 = vmatpush1.msra.mxu0 0.0
    %165 = vmatprep.subr.mxu0 0.0
    %166 = vmatpush1.msra.mxu0 0.0
    %167 = vmatprep.subr.mxu0 0.0
    %168 = vmatpush1.msra.mxu0 0.0
    %169 = vmatprep.subr.mxu0 0.0
    %170 = vmatpush1.msra.mxu0 0.0
    %171 = vmatprep.subr.mxu0 0.0
    %172 = vmatpush1.msra.mxu0 0.0
    %173 = vmatprep.subr.mxu0 0.0
    %174 = vmatpush1.msra.mxu0 0.0
    %175 = vmatprep.subr.mxu0 0.0
    %176 = vmatpush1.msra.mxu0 0.0
    %177 = vmatprep.subr.mxu0 0.0
    %178 = vmatpush1.msra.mxu0 0.0
    %179 = vmatprep.subr.mxu0 0.0
    %180 = vmatpush1.msra.mxu0 0.0
    %181 = vmatprep.subr.mxu0 0.0
    %182 = vmatpush1.msra.mxu0 0.0
    %183 = vmatprep.subr.mxu0 0.0
    %184 = vmatpush1.msra.mxu0 0.0
    %185 = vmatprep.subr.mxu0 0.0
    %186 = vmatpush1.msra.mxu0 0.0
    %187 = vmatprep.subr.mxu0 0.0
    %188 = vmatpush1.msra.mxu0 0.0
    %189 = vmatprep.mubr.f32.mxu0 0.0
    %v190 = vand.u32 %v75, 4294901760
    %v191 = vsub.f32 %v75, %v190
    %v192 = vand.u32 %v191, 4294901760
    %v193 = vsub.f32 %v191, %v192
    %v194 = vand.u32 %v193, 4294901760
    %195 = vmatmul.mubr.f32.gmra.mrb[0].mxu0 %v194
    %v196 = vpop.f32.mrb[0].mxu0
    %v197 = vadd.f32 0.0, %v196
    %v198 = vpop.f32.mrb[0].mxu0
    %199 = vdwg.mxu0
    %200 = vmatprep.subr.mxu0 0.0
    %v201 = vand.u32 %v93, 4294901760
    %v202 = vsub.f32 %v93, %v201
    %v203 = vand.u32 %v202, 4294901760
    %v204 = vsub.f32 %v202, %v203
    %v205 = vand.u32 %v204, 4294901760
    %206 = vmatpush1.msra.mxu0 %v205
    %207 = vmatprep.subr.mxu0 0.0
    %v208 = vand.u32 %v94, 4294901760
    %v209 = vsub.f32 %v94, %v208
    %v210 = vand.u32 %v209, 4294901760
    %v211 = vsub.f32 %v209, %v210
    %v212 = vand.u32 %v211, 4294901760
    %213 = vmatpush1.msra.mxu0 %v212
    %214 = vmatprep.subr.mxu0 0.0
    %v215 = vand.u32 %v95, 4294901760
    %v216 = vsub.f32 %v95, %v215
    %v217 = vand.u32 %v216, 4294901760
    %v218 = vsub.f32 %v216, %v217
    %v219 = vand.u32 %v218, 4294901760
    %220 = vmatpush1.msra.mxu0 %v219
    %221 = vmatprep.subr.mxu0 0.0
    %v222 = vand.u32 %v96, 4294901760
    %v223 = vsub.f32 %v96, %v222
    %v224 = vand.u32 %v223, 4294901760
    %v225 = vsub.f32 %v223, %v224
    %v226 = vand.u32 %v225, 4294901760
    %227 = vmatpush1.msra.mxu0 %v226
    %228 = vmatprep.subr.mxu0 0.0
    %v229 = vand.u32 %v97, 4294901760
    %v230 = vsub.f32 %v97, %v229
    %v231 = vand.u32 %v230, 4294901760
    %v232 = vsub.f32 %v230, %v231
    %v233 = vand.u32 %v232, 4294901760
    %234 = vmatpush1.msra.mxu0 %v233
    %235 = vmatprep.subr.mxu0 0.0
    %v236 = vand.u32 %v98, 4294901760
    %v237 = vsub.f32 %v98, %v236
    %v238 = vand.u32 %v237, 4294901760
    %v239 = vsub.f32 %v237, %v238
    %v240 = vand.u32 %v239, 4294901760
    %241 = vmatpush1.msra.mxu0 %v240
    %242 = vmatprep.subr.mxu0 0.0
    %v243 = vand.u32 %v99, 4294901760
    %v244 = vsub.f32 %v99, %v243
    %v245 = vand.u32 %v244, 4294901760
    %v246 = vsub.f32 %v244, %v245
    %v247 = vand.u32 %v246, 4294901760
    %248 = vmatpush1.msra.mxu0 %v247
    %249 = vmatprep.subr.mxu0 0.0
    %v250 = vand.u32 %v100, 4294901760
    %v251 = vsub.f32 %v100, %v250
    %v252 = vand.u32 %v251, 4294901760
    %v253 = vsub.f32 %v251, %v252
    %v254 = vand.u32 %v253, 4294901760
    %255 = vmatpush1.msra.mxu0 %v254
    %256 = vmatprep.subr.mxu0 0.0
    %v257 = vand.u32 %v101, 4294901760
    %v258 = vsub.f32 %v101, %v257
    %v259 = vand.u32 %v258, 4294901760
    %v260 = vsub.f32 %v258, %v259
    %v261 = vand.u32 %v260, 4294901760
    %262 = vmatpush1.msra.mxu0 %v261
    %263 = vmatprep.subr.mxu0 0.0
    %v264 = vand.u32 %v102, 4294901760
    %v265 = vsub.f32 %v102, %v264
    %v266 = vand.u32 %v265, 4294901760
    %v267 = vsub.f32 %v265, %v266
    %v268 = vand.u32 %v267, 4294901760
    %269 = vmatpush1.msra.mxu0 %v268
    %270 = vmatprep.subr.mxu0 0.0
    %v271 = vand.u32 %v103, 4294901760
    %v272 = vsub.f32 %v103, %v271
    %v273 = vand.u32 %v272, 4294901760
    %v274 = vsub.f32 %v272, %v273
    %v275 = vand.u32 %v274, 4294901760
    %276 = vmatpush1.msra.mxu0 %v275
    %277 = vmatprep.subr.mxu0 0.0
    %v278 = vand.u32 %v104, 4294901760
    %v279 = vsub.f32 %v104, %v278
    %v280 = vand.u32 %v279, 4294901760
    %v281 = vsub.f32 %v279, %v280
    %v282 = vand.u32 %v281, 4294901760
    %283 = vmatpush1.msra.mxu0 %v282
    %284 = vmatprep.subr.mxu0 0.0
    %v285 = vand.u32 %v105, 4294901760
    %v286 = vsub.f32 %v105, %v285
    %v287 = vand.u32 %v286, 4294901760
    %v288 = vsub.f32 %v286, %v287
    %v289 = vand.u32 %v288, 4294901760
    %290 = vmatpush1.msra.mxu0 %v289
    %291 = vmatprep.subr.mxu0 0.0
    %v292 = vand.u32 %v106, 4294901760
    %v293 = vsub.f32 %v106, %v292
    %v294 = vand.u32 %v293, 4294901760
    %v295 = vsub.f32 %v293, %v294
    %v296 = vand.u32 %v295, 4294901760
    %297 = vmatpush1.msra.mxu0 %v296
    %298 = vmatprep.subr.mxu0 0.0
    %v299 = vand.u32 %v107, 4294901760
    %v300 = vsub.f32 %v107, %v299
    %v301 = vand.u32 %v300, 4294901760
    %v302 = vsub.f32 %v300, %v301
    %v303 = vand.u32 %v302, 4294901760
    %304 = vmatpush1.msra.mxu0 %v303
    %305 = vmatprep.subr.mxu0 0.0
    %v306 = vand.u32 %v108, 4294901760
    %v307 = vsub.f32 %v108, %v306
    %v308 = vand.u32 %v307, 4294901760
    %v309 = vsub.f32 %v307, %v308
    %v310 = vand.u32 %v309, 4294901760
    %311 = vmatpush1.msra.mxu0 %v310
    %312 = vmatprep.subr.mxu0 0.0
    %313 = vmatpush1.msra.mxu0 0.0
    %314 = vmatprep.subr.mxu0 0.0
    %315 = vmatpush1.msra.mxu0 0.0
    %316 = vmatprep.subr.mxu0 0.0
    %317 = vmatpush1.msra.mxu0 0.0
    %318 = vmatprep.subr.mxu0 0.0
    %319 = vmatpush1.msra.mxu0 0.0
    %320 = vmatprep.subr.mxu0 0.0
    %321 = vmatpush1.msra.mxu0 0.0
    %322 = vmatprep.subr.mxu0 0.0
    %323 = vmatpush1.msra.mxu0 0.0
    %324 = vmatprep.subr.mxu0 0.0
    %325 = vmatpush1.msra.mxu0 0.0
    %326 = vmatprep.subr.mxu0 0.0
    %327 = vmatpush1.msra.mxu0 0.0
    %328 = vmatprep.subr.mxu0 0.0
    %329 = vmatpush1.msra.mxu0 0.0
    %330 = vmatprep.subr.mxu0 0.0
    %331 = vmatpush1.msra.mxu0 0.0
    %332 = vmatprep.subr.mxu0 0.0
    %333 = vmatpush1.msra.mxu0 0.0
    %334 = vmatprep.subr.mxu0 0.0
    %335 = vmatpush1.msra.mxu0 0.0
    %336 = vmatprep.subr.mxu0 0.0
    %337 = vmatpush1.msra.mxu0 0.0
    %338 = vmatprep.subr.mxu0 0.0
    %339 = vmatpush1.msra.mxu0 0.0
    %340 = vmatprep.subr.mxu0 0.0
    %341 = vmatpush1.msra.mxu0 0.0
    %342 = vmatprep.subr.mxu0 0.0
    %343 = vmatpush1.msra.mxu0 0.0
    %344 = vmatprep.mubr.f32.mxu0 0.0
    %v345 = vand.u32 %v75, 4294901760
    %346 = vmatmul.mubr.f32.gmra.mrb[0].mxu0 %v345
    %v347 = vpop.f32.mrb[0].mxu0
    %v348 = vadd.f32 %v197, %v347
    %v349 = vpop.f32.mrb[0].mxu0
    %350 = vdwg.mxu0
    %351 = vmatprep.subr.mxu0 0.0
    %v352 = vand.u32 %v93, 4294901760
    %v353 = vsub.f32 %v93, %v352
    %354 = vmatpush1.msra.mxu0 %v353
    %355 = vmatprep.subr.mxu0 0.0
    %v356 = vand.u32 %v94, 4294901760
    %v357 = vsub.f32 %v94, %v356
    %358 = vmatpush1.msra.mxu0 %v357
    %359 = vmatprep.subr.mxu0 0.0
    %v360 = vand.u32 %v95, 4294901760
    %v361 = vsub.f32 %v95, %v360
    %362 = vmatpush1.msra.mxu0 %v361
    %363 = vmatprep.subr.mxu0 0.0
    %v364 = vand.u32 %v96, 4294901760
    %v365 = vsub.f32 %v96, %v364
    %366 = vmatpush1.msra.mxu0 %v365
    %367 = vmatprep.subr.mxu0 0.0
    %v368 = vand.u32 %v97, 4294901760
    %v369 = vsub.f32 %v97, %v368
    %370 = vmatpush1.msra.mxu0 %v369
    %371 = vmatprep.subr.mxu0 0.0
    %v372 = vand.u32 %v98, 4294901760
    %v373 = vsub.f32 %v98, %v372
    %374 = vmatpush1.msra.mxu0 %v373
    %375 = vmatprep.subr.mxu0 0.0
    %v376 = vand.u32 %v99, 4294901760
    %v377 = vsub.f32 %v99, %v376
    %378 = vmatpush1.msra.mxu0 %v377
    %379 = vmatprep.subr.mxu0 0.0
    %v380 = vand.u32 %v100, 4294901760
    %v381 = vsub.f32 %v100, %v380
    %382 = vmatpush1.msra.mxu0 %v381
    %383 = vmatprep.subr.mxu0 0.0
    %v384 = vand.u32 %v101, 4294901760
    %v385 = vsub.f32 %v101, %v384
    %386 = vmatpush1.msra.mxu0 %v385
    %387 = vmatprep.subr.mxu0 0.0
    %v388 = vand.u32 %v102, 4294901760
    %v389 = vsub.f32 %v102, %v388
    %390 = vmatpush1.msra.mxu0 %v389
    %391 = vmatprep.subr.mxu0 0.0
    %v392 = vand.u32 %v103, 4294901760
    %v393 = vsub.f32 %v103, %v392
    %394 = vmatpush1.msra.mxu0 %v393
    %395 = vmatprep.subr.mxu0 0.0
    %v396 = vand.u32 %v104, 4294901760
    %v397 = vsub.f32 %v104, %v396
    %398 = vmatpush1.msra.mxu0 %v397
    %399 = vmatprep.subr.mxu0 0.0
    %v400 = vand.u32 %v105, 4294901760
    %v401 = vsub.f32 %v105, %v400
    %402 = vmatpush1.msra.mxu0 %v401
    %403 = vmatprep.subr.mxu0 0.0
    %v404 = vand.u32 %v106, 4294901760
    %v405 = vsub.f32 %v106, %v404
    %406 = vmatpush1.msra.mxu0 %v405
    %407 = vmatprep.subr.mxu0 0.0
    %v408 = vand.u32 %v107, 4294901760
    %v409 = vsub.f32 %v107, %v408
    %410 = vmatpush1.msra.mxu0 %v409
    %411 = vmatprep.subr.mxu0 0.0
    %v412 = vand.u32 %v108, 4294901760
    %v413 = vsub.f32 %v108, %v412
    %414 = vmatpush1.msra.mxu0 %v413
    %415 = vmatprep.subr.mxu0 0.0
    %416 = vmatpush1.msra.mxu0 0.0
    %417 = vmatprep.subr.mxu0 0.0
    %418 = vmatpush1.msra.mxu0 0.0
    %419 = vmatprep.subr.mxu0 0.0
    %420 = vmatpush1.msra.mxu0 0.0
    %421 = vmatprep.subr.mxu0 0.0
    %422 = vmatpush1.msra.mxu0 0.0
    %423 = vmatprep.subr.mxu0 0.0
    %424 = vmatpush1.msra.mxu0 0.0
    %425 = vmatprep.subr.mxu0 0.0
    %426 = vmatpush1.msra.mxu0 0.0
    %427 = vmatprep.subr.mxu0 0.0
    %428 = vmatpush1.msra.mxu0 0.0
    %429 = vmatprep.subr.mxu0 0.0
    %430 = vmatpush1.msra.mxu0 0.0
    %431 = vmatprep.subr.mxu0 0.0
    %432 = vmatpush1.msra.mxu0 0.0
    %433 = vmatprep.subr.mxu0 0.0
    %434 = vmatpush1.msra.mxu0 0.0
    %435 = vmatprep.subr.mxu0 0.0
    %436 = vmatpush1.msra.mxu0 0.0
    %437 = vmatprep.subr.mxu0 0.0
    %438 = vmatpush1.msra.mxu0 0.0
    %439 = vmatprep.subr.mxu0 0.0
    %440 = vmatpush1.msra.mxu0 0.0
    %441 = vmatprep.subr.mxu0 0.0
    %442 = vmatpush1.msra.mxu0 0.0
    %443 = vmatprep.subr.mxu0 0.0
    %444 = vmatpush1.msra.mxu0 0.0
    %445 = vmatprep.subr.mxu0 0.0
    %446 = vmatpush1.msra.mxu0 0.0
    %447 = vmatprep.mubr.f32.mxu0 0.0
    %v448 = vand.u32 %v75, 4294901760
    %v449 = vsub.f32 %v75, %v448
    %450 = vmatmul.mubr.f32.gmra.mrb[0].mxu0 %v449
    %v451 = vpop.f32.mrb[0].mxu0
    %v452 = vadd.f32 %v348, %v451
    %v453 = vpop.f32.mrb[0].mxu0
    %454 = vdwg.mxu0
    %455 = vmatprep.subr.mxu0 0.0
    %v456 = vand.u32 %v93, 4294901760
    %457 = vmatpush1.msra.mxu0 %v456
    %458 = vmatprep.subr.mxu0 0.0
    %v459 = vand.u32 %v94, 4294901760
    %460 = vmatpush1.msra.mxu0 %v459
    %461 = vmatprep.subr.mxu0 0.0
    %v462 = vand.u32 %v95, 4294901760
    %463 = vmatpush1.msra.mxu0 %v462
    %464 = vmatprep.subr.mxu0 0.0
    %v465 = vand.u32 %v96, 4294901760
    %466 = vmatpush1.msra.mxu0 %v465
    %467 = vmatprep.subr.mxu0 0.0
    %v468 = vand.u32 %v97, 4294901760
    %469 = vmatpush1.msra.mxu0 %v468
    %470 = vmatprep.subr.mxu0 0.0
    %v471 = vand.u32 %v98, 4294901760
    %472 = vmatpush1.msra.mxu0 %v471
    %473 = vmatprep.subr.mxu0 0.0
    %v474 = vand.u32 %v99, 4294901760
    %475 = vmatpush1.msra.mxu0 %v474
    %476 = vmatprep.subr.mxu0 0.0
    %v477 = vand.u32 %v100, 4294901760
    %478 = vmatpush1.msra.mxu0 %v477
    %479 = vmatprep.subr.mxu0 0.0
    %v480 = vand.u32 %v101, 4294901760
    %481 = vmatpush1.msra.mxu0 %v480
    %482 = vmatprep.subr.mxu0 0.0
    %v483 = vand.u32 %v102, 4294901760
    %484 = vmatpush1.msra.mxu0 %v483
    %485 = vmatprep.subr.mxu0 0.0
    %v486 = vand.u32 %v103, 4294901760
    %487 = vmatpush1.msra.mxu0 %v486
    %488 = vmatprep.subr.mxu0 0.0
    %v489 = vand.u32 %v104, 4294901760
    %490 = vmatpush1.msra.mxu0 %v489
    %491 = vmatprep.subr.mxu0 0.0
    %v492 = vand.u32 %v105, 4294901760
    %493 = vmatpush1.msra.mxu0 %v492
    %494 = vmatprep.subr.mxu0 0.0
    %v495 = vand.u32 %v106, 4294901760
    %496 = vmatpush1.msra.mxu0 %v495
    %497 = vmatprep.subr.mxu0 0.0
    %v498 = vand.u32 %v107, 4294901760
    %499 = vmatpush1.msra.mxu0 %v498
    %500 = vmatprep.subr.mxu0 0.0
    %v501 = vand.u32 %v108, 4294901760
    %502 = vmatpush1.msra.mxu0 %v501
    %503 = vmatprep.subr.mxu0 0.0
    %504 = vmatpush1.msra.mxu0 0.0
    %505 = vmatprep.subr.mxu0 0.0
    %506 = vmatpush1.msra.mxu0 0.0
    %507 = vmatprep.subr.mxu0 0.0
    %508 = vmatpush1.msra.mxu0 0.0
    %509 = vmatprep.subr.mxu0 0.0
    %510 = vmatpush1.msra.mxu0 0.0
    %511 = vmatprep.subr.mxu0 0.0
    %512 = vmatpush1.msra.mxu0 0.0
    %513 = vmatprep.subr.mxu0 0.0
    %514 = vmatpush1.msra.mxu0 0.0
    %515 = vmatprep.subr.mxu0 0.0
    %516 = vmatpush1.msra.mxu0 0.0
    %517 = vmatprep.subr.mxu0 0.0
    %518 = vmatpush1.msra.mxu0 0.0
    %519 = vmatprep.subr.mxu0 0.0
    %520 = vmatpush1.msra.mxu0 0.0
    %521 = vmatprep.subr.mxu0 0.0
    %522 = vmatpush1.msra.mxu0 0.0
    %523 = vmatprep.subr.mxu0 0.0
    %524 = vmatpush1.msra.mxu0 0.0
    %525 = vmatprep.subr.mxu0 0.0
    %526 = vmatpush1.msra.mxu0 0.0
    %527 = vmatprep.subr.mxu0 0.0
    %528 = vmatpush1.msra.mxu0 0.0
    %529 = vmatprep.subr.mxu0 0.0
    %530 = vmatpush1.msra.mxu0 0.0
    %531 = vmatprep.subr.mxu0 0.0
    %532 = vmatpush1.msra.mxu0 0.0
    %533 = vmatprep.subr.mxu0 0.0
    %534 = vmatpush1.msra.mxu0 0.0
    %535 = vmatprep.mubr.f32.mxu0 0.0
    %v536 = vand.u32 %v75, 4294901760
    %v537 = vsub.f32 %v75, %v536
    %v538 = vand.u32 %v537, 4294901760
    %539 = vmatmul.mubr.f32.gmra.mrb[0].mxu0 %v538
    %v540 = vpop.f32.mrb[0].mxu0
    %v541 = vadd.f32 %v452, %v540
    %v542 = vpop.f32.mrb[0].mxu0
    %543 = vdwg.mxu0
    %544 = vmatprep.subr.mxu0 0.0
    %v545 = vand.u32 %v93, 4294901760
    %v546 = vsub.f32 %v93, %v545
    %v547 = vand.u32 %v546, 4294901760
    %548 = vmatpush1.msra.mxu0 %v547
    %549 = vmatprep.subr.mxu0 0.0
    %v550 = vand.u32 %v94, 4294901760
    %v551 = vsub.f32 %v94, %v550
    %v552 = vand.u32 %v551, 4294901760
    %553 = vmatpush1.msra.mxu0 %v552
    %554 = vmatprep.subr.mxu0 0.0
    %v555 = vand.u32 %v95, 4294901760
    %v556 = vsub.f32 %v95, %v555
    %v557 = vand.u32 %v556, 4294901760
    %558 = vmatpush1.msra.mxu0 %v557
    %559 = vmatprep.subr.mxu0 0.0
    %v560 = vand.u32 %v96, 4294901760
    %v561 = vsub.f32 %v96, %v560
    %v562 = vand.u32 %v561, 4294901760
    %563 = vmatpush1.msra.mxu0 %v562
    %564 = vmatprep.subr.mxu0 0.0
    %v565 = vand.u32 %v97, 4294901760
    %v566 = vsub.f32 %v97, %v565
    %v567 = vand.u32 %v566, 4294901760
    %568 = vmatpush1.msra.mxu0 %v567
    %569 = vmatprep.subr.mxu0 0.0
    %v570 = vand.u32 %v98, 4294901760
    %v571 = vsub.f32 %v98, %v570
    %v572 = vand.u32 %v571, 4294901760
    %573 = vmatpush1.msra.mxu0 %v572
    %574 = vmatprep.subr.mxu0 0.0
    %v575 = vand.u32 %v99, 4294901760
    %v576 = vsub.f32 %v99, %v575
    %v577 = vand.u32 %v576, 4294901760
    %578 = vmatpush1.msra.mxu0 %v577
    %579 = vmatprep.subr.mxu0 0.0
    %v580 = vand.u32 %v100, 4294901760
    %v581 = vsub.f32 %v100, %v580
    %v582 = vand.u32 %v581, 4294901760
    %583 = vmatpush1.msra.mxu0 %v582
    %584 = vmatprep.subr.mxu0 0.0
    %v585 = vand.u32 %v101, 4294901760
    %v586 = vsub.f32 %v101, %v585
    %v587 = vand.u32 %v586, 4294901760
    %588 = vmatpush1.msra.mxu0 %v587
    %589 = vmatprep.subr.mxu0 0.0
    %v590 = vand.u32 %v102, 4294901760
    %v591 = vsub.f32 %v102, %v590
    %v592 = vand.u32 %v591, 4294901760
    %593 = vmatpush1.msra.mxu0 %v592
    %594 = vmatprep.subr.mxu0 0.0
    %v595 = vand.u32 %v103, 4294901760
    %v596 = vsub.f32 %v103, %v595
    %v597 = vand.u32 %v596, 4294901760
    %598 = vmatpush1.msra.mxu0 %v597
    %599 = vmatprep.subr.mxu0 0.0
    %v600 = vand.u32 %v104, 4294901760
    %v601 = vsub.f32 %v104, %v600
    %v602 = vand.u32 %v601, 4294901760
    %603 = vmatpush1.msra.mxu0 %v602
    %604 = vmatprep.subr.mxu0 0.0
    %v605 = vand.u32 %v105, 4294901760
    %v606 = vsub.f32 %v105, %v605
    %v607 = vand.u32 %v606, 4294901760
    %608 = vmatpush1.msra.mxu0 %v607
    %609 = vmatprep.subr.mxu0 0.0
    %v610 = vand.u32 %v106, 4294901760
    %v611 = vsub.f32 %v106, %v610
    %v612 = vand.u32 %v611, 4294901760
    %613 = vmatpush1.msra.mxu0 %v612
    %614 = vmatprep.subr.mxu0 0.0
    %v615 = vand.u32 %v107, 4294901760
    %v616 = vsub.f32 %v107, %v615
    %v617 = vand.u32 %v616, 4294901760
    %618 = vmatpush1.msra.mxu0 %v617
    %619 = vmatprep.subr.mxu0 0.0
    %v620 = vand.u32 %v108, 4294901760
    %v621 = vsub.f32 %v108, %v620
    %v622 = vand.u32 %v621, 4294901760
    %623 = vmatpush1.msra.mxu0 %v622
    %624 = vmatprep.subr.mxu0 0.0
    %625 = vmatpush1.msra.mxu0 0.0
    %626 = vmatprep.subr.mxu0 0.0
    %627 = vmatpush1.msra.mxu0 0.0
    %628 = vmatprep.subr.mxu0 0.0
    %629 = vmatpush1.msra.mxu0 0.0
    %630 = vmatprep.subr.mxu0 0.0
    %631 = vmatpush1.msra.mxu0 0.0
    %632 = vmatprep.subr.mxu0 0.0
    %633 = vmatpush1.msra.mxu0 0.0
    %634 = vmatprep.subr.mxu0 0.0
    %635 = vmatpush1.msra.mxu0 0.0
    %636 = vmatprep.subr.mxu0 0.0
    %637 = vmatpush1.msra.mxu0 0.0
    %638 = vmatprep.subr.mxu0 0.0
    %639 = vmatpush1.msra.mxu0 0.0
    %640 = vmatprep.subr.mxu0 0.0
    %641 = vmatpush1.msra.mxu0 0.0
    %642 = vmatprep.subr.mxu0 0.0
    %643 = vmatpush1.msra.mxu0 0.0
    %644 = vmatprep.subr.mxu0 0.0
    %645 = vmatpush1.msra.mxu0 0.0
    %646 = vmatprep.subr.mxu0 0.0
    %647 = vmatpush1.msra.mxu0 0.0
    %648 = vmatprep.subr.mxu0 0.0
    %649 = vmatpush1.msra.mxu0 0.0
    %650 = vmatprep.subr.mxu0 0.0
    %651 = vmatpush1.msra.mxu0 0.0
    %652 = vmatprep.subr.mxu0 0.0
    %653 = vmatpush1.msra.mxu0 0.0
    %654 = vmatprep.subr.mxu0 0.0
    %655 = vmatpush1.msra.mxu0 0.0
    %656 = vmatprep.mubr.f32.mxu0 0.0
    %v657 = vand.u32 %v75, 4294901760
    %658 = vmatmul.mubr.f32.gmra.mrb[0].mxu0 %v657
    %v659 = vpop.f32.mrb[0].mxu0
    %v660 = vadd.f32 %v541, %v659
    %v661 = vpop.f32.mrb[0].mxu0
    %662 = vdwg.mxu0
    %663 = vmatprep.subr.mxu0 0.0
    %v664 = vand.u32 %v93, 4294901760
    %665 = vmatpush1.msra.mxu0 %v664
    %666 = vmatprep.subr.mxu0 0.0
    %v667 = vand.u32 %v94, 4294901760
    %668 = vmatpush1.msra.mxu0 %v667
    %669 = vmatprep.subr.mxu0 0.0
    %v670 = vand.u32 %v95, 4294901760
    %671 = vmatpush1.msra.mxu0 %v670
    %672 = vmatprep.subr.mxu0 0.0
    %v673 = vand.u32 %v96, 4294901760
    %674 = vmatpush1.msra.mxu0 %v673
    %675 = vmatprep.subr.mxu0 0.0
    %v676 = vand.u32 %v97, 4294901760
    %677 = vmatpush1.msra.mxu0 %v676
    %678 = vmatprep.subr.mxu0 0.0
    %v679 = vand.u32 %v98, 4294901760
    %680 = vmatpush1.msra.mxu0 %v679
    %681 = vmatprep.subr.mxu0 0.0
    %v682 = vand.u32 %v99, 4294901760
    %683 = vmatpush1.msra.mxu0 %v682
    %684 = vmatprep.subr.mxu0 0.0
    %v685 = vand.u32 %v100, 4294901760
    %686 = vmatpush1.msra.mxu0 %v685
    %687 = vmatprep.subr.mxu0 0.0
    %v688 = vand.u32 %v101, 4294901760
    %689 = vmatpush1.msra.mxu0 %v688
    %690 = vmatprep.subr.mxu0 0.0
    %v691 = vand.u32 %v102, 4294901760
    %692 = vmatpush1.msra.mxu0 %v691
    %693 = vmatprep.subr.mxu0 0.0
    %v694 = vand.u32 %v103, 4294901760
    %695 = vmatpush1.msra.mxu0 %v694
    %696 = vmatprep.subr.mxu0 0.0
    %v697 = vand.u32 %v104, 4294901760
    %698 = vmatpush1.msra.mxu0 %v697
    %699 = vmatprep.subr.mxu0 0.0
    %v700 = vand.u32 %v105, 4294901760
    %701 = vmatpush1.msra.mxu0 %v700
    %702 = vmatprep.subr.mxu0 0.0
    %v703 = vand.u32 %v106, 4294901760
    %704 = vmatpush1.msra.mxu0 %v703
    %705 = vmatprep.subr.mxu0 0.0
    %v706 = vand.u32 %v107, 4294901760
    %707 = vmatpush1.msra.mxu0 %v706
    %708 = vmatprep.subr.mxu0 0.0
    %v709 = vand.u32 %v108, 4294901760
    %710 = vmatpush1.msra.mxu0 %v709
    %711 = vmatprep.subr.mxu0 0.0
    %712 = vmatpush1.msra.mxu0 0.0
    %713 = vmatprep.subr.mxu0 0.0
    %714 = vmatpush1.msra.mxu0 0.0
    %715 = vmatprep.subr.mxu0 0.0
    %716 = vmatpush1.msra.mxu0 0.0
    %717 = vmatprep.subr.mxu0 0.0
    %718 = vmatpush1.msra.mxu0 0.0
    %719 = vmatprep.subr.mxu0 0.0
    %720 = vmatpush1.msra.mxu0 0.0
    %721 = vmatprep.subr.mxu0 0.0
    %722 = vmatpush1.msra.mxu0 0.0
    %723 = vmatprep.subr.mxu0 0.0
    %724 = vmatpush1.msra.mxu0 0.0
    %725 = vmatprep.subr.mxu0 0.0
    %726 = vmatpush1.msra.mxu0 0.0
    %727 = vmatprep.subr.mxu0 0.0
    %728 = vmatpush1.msra.mxu0 0.0
    %729 = vmatprep.subr.mxu0 0.0
    %730 = vmatpush1.msra.mxu0 0.0
    %731 = vmatprep.subr.mxu0 0.0
    %732 = vmatpush1.msra.mxu0 0.0
    %733 = vmatprep.subr.mxu0 0.0
    %734 = vmatpush1.msra.mxu0 0.0
    %735 = vmatprep.subr.mxu0 0.0
    %736 = vmatpush1.msra.mxu0 0.0
    %737 = vmatprep.subr.mxu0 0.0
    %738 = vmatpush1.msra.mxu0 0.0
    %739 = vmatprep.subr.mxu0 0.0
    %740 = vmatpush1.msra.mxu0 0.0
    %741 = vmatprep.subr.mxu0 0.0
    %742 = vmatpush1.msra.mxu0 0.0
    %743 = vmatprep.mubr.f32.mxu0 0.0
    %v744 = vand.u32 %v75, 4294901760
    %745 = vmatmul.mubr.f32.gmra.mrb[0].mxu0 %v744
    %v746 = vpop.f32.mrb[0].mxu0
    %v747 = vadd.f32 %v660, %v746
    %v748 = vpop.f32.mrb[0].mxu0
    %749 = vdwg.mxu0
    %750 = vmatprep.subr.mxu0 0.0
    %v751 = vand.u32 %v77, 4294901760
    %752 = vmatpush1.msra.mxu0 %v751
    %753 = vmatprep.subr.mxu0 0.0
    %v754 = vand.u32 %v78, 4294901760
    %755 = vmatpush1.msra.mxu0 %v754
    %756 = vmatprep.subr.mxu0 0.0
    %v757 = vand.u32 %v79, 4294901760
    %758 = vmatpush1.msra.mxu0 %v757
    %759 = vmatprep.subr.mxu0 0.0
    %v760 = vand.u32 %v80, 4294901760
    %761 = vmatpush1.msra.mxu0 %v760
    %762 = vmatprep.subr.mxu0 0.0
    %v763 = vand.u32 %v81, 4294901760
    %764 = vmatpush1.msra.mxu0 %v763
    %765 = vmatprep.subr.mxu0 0.0
    %v766 = vand.u32 %v82, 4294901760
    %767 = vmatpush1.msra.mxu0 %v766
    %768 = vmatprep.subr.mxu0 0.0
    %v769 = vand.u32 %v83, 4294901760
    %770 = vmatpush1.msra.mxu0 %v769
    %771 = vmatprep.subr.mxu0 0.0
    %v772 = vand.u32 %v84, 4294901760
    %773 = vmatpush1.msra.mxu0 %v772
    %774 = vmatprep.subr.mxu0 0.0
    %v775 = vand.u32 %v85, 4294901760
    %776 = vmatpush1.msra.mxu0 %v775
    %777 = vmatprep.subr.mxu0 0.0
    %v778 = vand.u32 %v86, 4294901760
    %779 = vmatpush1.msra.mxu0 %v778
    %780 = vmatprep.subr.mxu0 0.0
    %v781 = vand.u32 %v87, 4294901760
    %782 = vmatpush1.msra.mxu0 %v781
    %783 = vmatprep.subr.mxu0 0.0
    %v784 = vand.u32 %v88, 4294901760
    %785 = vmatpush1.msra.mxu0 %v784
    %786 = vmatprep.subr.mxu0 0.0
    %v787 = vand.u32 %v89, 4294901760
    %788 = vmatpush1.msra.mxu0 %v787
    %789 = vmatprep.subr.mxu0 0.0
    %v790 = vand.u32 %v90, 4294901760
    %791 = vmatpush1.msra.mxu0 %v790
    %792 = vmatprep.subr.mxu0 0.0
    %v793 = vand.u32 %v91, 4294901760
    %794 = vmatpush1.msra.mxu0 %v793
    %795 = vmatprep.subr.mxu0 0.0
    %v796 = vand.u32 %v92, 4294901760
    %797 = vmatpush1.msra.mxu0 %v796
    %798 = vmatprep.subr.mxu0 0.0
    %799 = vmatpush1.msra.mxu0 0.0
    %800 = vmatprep.subr.mxu0 0.0
    %801 = vmatpush1.msra.mxu0 0.0
    %802 = vmatprep.subr.mxu0 0.0
    %803 = vmatpush1.msra.mxu0 0.0
    %804 = vmatprep.subr.mxu0 0.0
    %805 = vmatpush1.msra.mxu0 0.0
    %806 = vmatprep.subr.mxu0 0.0
    %807 = vmatpush1.msra.mxu0 0.0
    %808 = vmatprep.subr.mxu0 0.0
    %809 = vmatpush1.msra.mxu0 0.0
    %810 = vmatprep.subr.mxu0 0.0
    %811 = vmatpush1.msra.mxu0 0.0
    %812 = vmatprep.subr.mxu0 0.0
    %813 = vmatpush1.msra.mxu0 0.0
    %814 = vmatprep.subr.mxu0 0.0
    %815 = vmatpush1.msra.mxu0 0.0
    %816 = vmatprep.subr.mxu0 0.0
    %817 = vmatpush1.msra.mxu0 0.0
    %818 = vmatprep.subr.mxu0 0.0
    %819 = vmatpush1.msra.mxu0 0.0
    %820 = vmatprep.subr.mxu0 0.0
    %821 = vmatpush1.msra.mxu0 0.0
    %822 = vmatprep.subr.mxu0 0.0
    %823 = vmatpush1.msra.mxu0 0.0
    %824 = vmatprep.subr.mxu0 0.0
    %825 = vmatpush1.msra.mxu0 0.0
    %826 = vmatprep.subr.mxu0 0.0
    %827 = vmatpush1.msra.mxu0 0.0
    %828 = vmatprep.subr.mxu0 0.0
    %829 = vmatpush1.msra.mxu0 0.0
    %830 = vmatprep.mubr.f32.mxu0 0.0
    %v831 = vand.u32 %v76, 4294901760
    %v832 = vsub.f32 %v76, %v831
    %v833 = vand.u32 %v832, 4294901760
    %v834 = vsub.f32 %v832, %v833
    %v835 = vand.u32 %v834, 4294901760
    %836 = vmatmul.mubr.f32.gmra.mrb[0].mxu0 %v835
    %v837 = vpop.f32.mrb[0].mxu0
    %v838 = vadd.f32 %v747, %v837
    %v839 = vpop.f32.mrb[0].mxu0
    %840 = vdwg.mxu0
    %841 = vmatprep.subr.mxu0 0.0
    %v842 = vand.u32 %v77, 4294901760
    %v843 = vsub.f32 %v77, %v842
    %v844 = vand.u32 %v843, 4294901760
    %v845 = vsub.f32 %v843, %v844
    %v846 = vand.u32 %v845, 4294901760
    %847 = vmatpush1.msra.mxu0 %v846
    %848 = vmatprep.subr.mxu0 0.0
    %v849 = vand.u32 %v78, 4294901760
    %v850 = vsub.f32 %v78, %v849
    %v851 = vand.u32 %v850, 4294901760
    %v852 = vsub.f32 %v850, %v851
    %v853 = vand.u32 %v852, 4294901760
    %854 = vmatpush1.msra.mxu0 %v853
    %855 = vmatprep.subr.mxu0 0.0
    %v856 = vand.u32 %v79, 4294901760
    %v857 = vsub.f32 %v79, %v856
    %v858 = vand.u32 %v857, 4294901760
    %v859 = vsub.f32 %v857, %v858
    %v860 = vand.u32 %v859, 4294901760
    %861 = vmatpush1.msra.mxu0 %v860
    %862 = vmatprep.subr.mxu0 0.0
    %v863 = vand.u32 %v80, 4294901760
    %v864 = vsub.f32 %v80, %v863
    %v865 = vand.u32 %v864, 4294901760
    %v866 = vsub.f32 %v864, %v865
    %v867 = vand.u32 %v866, 4294901760
    %868 = vmatpush1.msra.mxu0 %v867
    %869 = vmatprep.subr.mxu0 0.0
    %v870 = vand.u32 %v81, 4294901760
    %v871 = vsub.f32 %v81, %v870
    %v872 = vand.u32 %v871, 4294901760
    %v873 = vsub.f32 %v871, %v872
    %v874 = vand.u32 %v873, 4294901760
    %875 = vmatpush1.msra.mxu0 %v874
    %876 = vmatprep.subr.mxu0 0.0
    %v877 = vand.u32 %v82, 4294901760
    %v878 = vsub.f32 %v82, %v877
    %v879 = vand.u32 %v878, 4294901760
    %v880 = vsub.f32 %v878, %v879
    %v881 = vand.u32 %v880, 4294901760
    %882 = vmatpush1.msra.mxu0 %v881
    %883 = vmatprep.subr.mxu0 0.0
    %v884 = vand.u32 %v83, 4294901760
    %v885 = vsub.f32 %v83, %v884
    %v886 = vand.u32 %v885, 4294901760
    %v887 = vsub.f32 %v885, %v886
    %v888 = vand.u32 %v887, 4294901760
    %889 = vmatpush1.msra.mxu0 %v888
    %890 = vmatprep.subr.mxu0 0.0
    %v891 = vand.u32 %v84, 4294901760
    %v892 = vsub.f32 %v84, %v891
    %v893 = vand.u32 %v892, 4294901760
    %v894 = vsub.f32 %v892, %v893
    %v895 = vand.u32 %v894, 4294901760
    %896 = vmatpush1.msra.mxu0 %v895
    %897 = vmatprep.subr.mxu0 0.0
    %v898 = vand.u32 %v85, 4294901760
    %v899 = vsub.f32 %v85, %v898
    %v900 = vand.u32 %v899, 4294901760
    %v901 = vsub.f32 %v899, %v900
    %v902 = vand.u32 %v901, 4294901760
    %903 = vmatpush1.msra.mxu0 %v902
    %904 = vmatprep.subr.mxu0 0.0
    %v905 = vand.u32 %v86, 4294901760
    %v906 = vsub.f32 %v86, %v905
    %v907 = vand.u32 %v906, 4294901760
    %v908 = vsub.f32 %v906, %v907
    %v909 = vand.u32 %v908, 4294901760
    %910 = vmatpush1.msra.mxu0 %v909
    %911 = vmatprep.subr.mxu0 0.0
    %v912 = vand.u32 %v87, 4294901760
    %v913 = vsub.f32 %v87, %v912
    %v914 = vand.u32 %v913, 4294901760
    %v915 = vsub.f32 %v913, %v914
    %v916 = vand.u32 %v915, 4294901760
    %917 = vmatpush1.msra.mxu0 %v916
    %918 = vmatprep.subr.mxu0 0.0
    %v919 = vand.u32 %v88, 4294901760
    %v920 = vsub.f32 %v88, %v919
    %v921 = vand.u32 %v920, 4294901760
    %v922 = vsub.f32 %v920, %v921
    %v923 = vand.u32 %v922, 4294901760
    %924 = vmatpush1.msra.mxu0 %v923
    %925 = vmatprep.subr.mxu0 0.0
    %v926 = vand.u32 %v89, 4294901760
    %v927 = vsub.f32 %v89, %v926
    %v928 = vand.u32 %v927, 4294901760
    %v929 = vsub.f32 %v927, %v928
    %v930 = vand.u32 %v929, 4294901760
    %931 = vmatpush1.msra.mxu0 %v930
    %932 = vmatprep.subr.mxu0 0.0
    %v933 = vand.u32 %v90, 4294901760
    %v934 = vsub.f32 %v90, %v933
    %v935 = vand.u32 %v934, 4294901760
    %v936 = vsub.f32 %v934, %v935
    %v937 = vand.u32 %v936, 4294901760
    %938 = vmatpush1.msra.mxu0 %v937
    %939 = vmatprep.subr.mxu0 0.0
    %v940 = vand.u32 %v91, 4294901760
    %v941 = vsub.f32 %v91, %v940
    %v942 = vand.u32 %v941, 4294901760
    %v943 = vsub.f32 %v941, %v942
    %v944 = vand.u32 %v943, 4294901760
    %945 = vmatpush1.msra.mxu0 %v944
    %946 = vmatprep.subr.mxu0 0.0
    %v947 = vand.u32 %v92, 4294901760
    %v948 = vsub.f32 %v92, %v947
    %v949 = vand.u32 %v948, 4294901760
    %v950 = vsub.f32 %v948, %v949
    %v951 = vand.u32 %v950, 4294901760
    %952 = vmatpush1.msra.mxu0 %v951
    %953 = vmatprep.subr.mxu0 0.0
    %954 = vmatpush1.msra.mxu0 0.0
    %955 = vmatprep.subr.mxu0 0.0
    %956 = vmatpush1.msra.mxu0 0.0
    %957 = vmatprep.subr.mxu0 0.0
    %958 = vmatpush1.msra.mxu0 0.0
    %959 = vmatprep.subr.mxu0 0.0
    %960 = vmatpush1.msra.mxu0 0.0
    %961 = vmatprep.subr.mxu0 0.0
    %962 = vmatpush1.msra.mxu0 0.0
    %963 = vmatprep.subr.mxu0 0.0
    %964 = vmatpush1.msra.mxu0 0.0
    %965 = vmatprep.subr.mxu0 0.0
    %966 = vmatpush1.msra.mxu0 0.0
    %967 = vmatprep.subr.mxu0 0.0
    %968 = vmatpush1.msra.mxu0 0.0
    %969 = vmatprep.subr.mxu0 0.0
    %970 = vmatpush1.msra.mxu0 0.0
    %971 = vmatprep.subr.mxu0 0.0
    %972 = vmatpush1.msra.mxu0 0.0
    %973 = vmatprep.subr.mxu0 0.0
    %974 = vmatpush1.msra.mxu0 0.0
    %975 = vmatprep.subr.mxu0 0.0
    %976 = vmatpush1.msra.mxu0 0.0
    %977 = vmatprep.subr.mxu0 0.0
    %978 = vmatpush1.msra.mxu0 0.0
    %979 = vmatprep.subr.mxu0 0.0
    %980 = vmatpush1.msra.mxu0 0.0
    %981 = vmatprep.subr.mxu0 0.0
    %982 = vmatpush1.msra.mxu0 0.0
    %983 = vmatprep.subr.mxu0 0.0
    %984 = vmatpush1.msra.mxu0 0.0
    %985 = vmatprep.mubr.f32.mxu0 0.0
    %v986 = vand.u32 %v76, 4294901760
    %987 = vmatmul.mubr.f32.gmra.mrb[0].mxu0 %v986
    %v988 = vpop.f32.mrb[0].mxu0
    %v989 = vadd.f32 %v838, %v988
    %v990 = vpop.f32.mrb[0].mxu0
    %991 = vdwg.mxu0
    %992 = vmatprep.subr.mxu0 0.0
    %v993 = vand.u32 %v77, 4294901760
    %v994 = vsub.f32 %v77, %v993
    %995 = vmatpush1.msra.mxu0 %v994
    %996 = vmatprep.subr.mxu0 0.0
    %v997 = vand.u32 %v78, 4294901760
    %v998 = vsub.f32 %v78, %v997
    %999 = vmatpush1.msra.mxu0 %v998
    %1000 = vmatprep.subr.mxu0 0.0
    %v1001 = vand.u32 %v79, 4294901760
    %v1002 = vsub.f32 %v79, %v1001
    %1003 = vmatpush1.msra.mxu0 %v1002
    %1004 = vmatprep.subr.mxu0 0.0
    %v1005 = vand.u32 %v80, 4294901760
    %v1006 = vsub.f32 %v80, %v1005
    %1007 = vmatpush1.msra.mxu0 %v1006
    %1008 = vmatprep.subr.mxu0 0.0
    %v1009 = vand.u32 %v81, 4294901760
    %v1010 = vsub.f32 %v81, %v1009
    %1011 = vmatpush1.msra.mxu0 %v1010
    %1012 = vmatprep.subr.mxu0 0.0
    %v1013 = vand.u32 %v82, 4294901760
    %v1014 = vsub.f32 %v82, %v1013
    %1015 = vmatpush1.msra.mxu0 %v1014
    %1016 = vmatprep.subr.mxu0 0.0
    %v1017 = vand.u32 %v83, 4294901760
    %v1018 = vsub.f32 %v83, %v1017
    %1019 = vmatpush1.msra.mxu0 %v1018
    %1020 = vmatprep.subr.mxu0 0.0
    %v1021 = vand.u32 %v84, 4294901760
    %v1022 = vsub.f32 %v84, %v1021
    %1023 = vmatpush1.msra.mxu0 %v1022
    %1024 = vmatprep.subr.mxu0 0.0
    %v1025 = vand.u32 %v85, 4294901760
    %v1026 = vsub.f32 %v85, %v1025
    %1027 = vmatpush1.msra.mxu0 %v1026
    %1028 = vmatprep.subr.mxu0 0.0
    %v1029 = vand.u32 %v86, 4294901760
    %v1030 = vsub.f32 %v86, %v1029
    %1031 = vmatpush1.msra.mxu0 %v1030
    %1032 = vmatprep.subr.mxu0 0.0
    %v1033 = vand.u32 %v87, 4294901760
    %v1034 = vsub.f32 %v87, %v1033
    %1035 = vmatpush1.msra.mxu0 %v1034
    %1036 = vmatprep.subr.mxu0 0.0
    %v1037 = vand.u32 %v88, 4294901760
    %v1038 = vsub.f32 %v88, %v1037
    %1039 = vmatpush1.msra.mxu0 %v1038
    %1040 = vmatprep.subr.mxu0 0.0
    %v1041 = vand.u32 %v89, 4294901760
    %v1042 = vsub.f32 %v89, %v1041
    %1043 = vmatpush1.msra.mxu0 %v1042
    %1044 = vmatprep.subr.mxu0 0.0
    %v1045 = vand.u32 %v90, 4294901760
    %v1046 = vsub.f32 %v90, %v1045
    %1047 = vmatpush1.msra.mxu0 %v1046
    %1048 = vmatprep.subr.mxu0 0.0
    %v1049 = vand.u32 %v91, 4294901760
    %v1050 = vsub.f32 %v91, %v1049
    %1051 = vmatpush1.msra.mxu0 %v1050
    %1052 = vmatprep.subr.mxu0 0.0
    %v1053 = vand.u32 %v92, 4294901760
    %v1054 = vsub.f32 %v92, %v1053
    %1055 = vmatpush1.msra.mxu0 %v1054
    %1056 = vmatprep.subr.mxu0 0.0
    %1057 = vmatpush1.msra.mxu0 0.0
    %1058 = vmatprep.subr.mxu0 0.0
    %1059 = vmatpush1.msra.mxu0 0.0
    %1060 = vmatprep.subr.mxu0 0.0
    %1061 = vmatpush1.msra.mxu0 0.0
    %1062 = vmatprep.subr.mxu0 0.0
    %1063 = vmatpush1.msra.mxu0 0.0
    %1064 = vmatprep.subr.mxu0 0.0
    %1065 = vmatpush1.msra.mxu0 0.0
    %1066 = vmatprep.subr.mxu0 0.0
    %1067 = vmatpush1.msra.mxu0 0.0
    %1068 = vmatprep.subr.mxu0 0.0
    %1069 = vmatpush1.msra.mxu0 0.0
    %1070 = vmatprep.subr.mxu0 0.0
    %1071 = vmatpush1.msra.mxu0 0.0
    %1072 = vmatprep.subr.mxu0 0.0
    %1073 = vmatpush1.msra.mxu0 0.0
    %1074 = vmatprep.subr.mxu0 0.0
    %1075 = vmatpush1.msra.mxu0 0.0
    %1076 = vmatprep.subr.mxu0 0.0
    %1077 = vmatpush1.msra.mxu0 0.0
    %1078 = vmatprep.subr.mxu0 0.0
    %1079 = vmatpush1.msra.mxu0 0.0
    %1080 = vmatprep.subr.mxu0 0.0
    %1081 = vmatpush1.msra.mxu0 0.0
    %1082 = vmatprep.subr.mxu0 0.0
    %1083 = vmatpush1.msra.mxu0 0.0
    %1084 = vmatprep.subr.mxu0 0.0
    %1085 = vmatpush1.msra.mxu0 0.0
    %1086 = vmatprep.subr.mxu0 0.0
    %1087 = vmatpush1.msra.mxu0 0.0
    %1088 = vmatprep.mubr.f32.mxu0 0.0
    %v1089 = vand.u32 %v76, 4294901760
    %v1090 = vsub.f32 %v76, %v1089
    %1091 = vmatmul.mubr.f32.gmra.mrb[0].mxu0 %v1090
    %v1092 = vpop.f32.mrb[0].mxu0
    %v1093 = vadd.f32 %v989, %v1092
    %v1094 = vpop.f32.mrb[0].mxu0
    %1095 = vdwg.mxu0
    %1096 = vmatprep.subr.mxu0 0.0
    %v1097 = vand.u32 %v77, 4294901760
    %1098 = vmatpush1.msra.mxu0 %v1097
    %1099 = vmatprep.subr.mxu0 0.0
    %v1100 = vand.u32 %v78, 4294901760
    %1101 = vmatpush1.msra.mxu0 %v1100
    %1102 = vmatprep.subr.mxu0 0.0
    %v1103 = vand.u32 %v79, 4294901760
    %1104 = vmatpush1.msra.mxu0 %v1103
    %1105 = vmatprep.subr.mxu0 0.0
    %v1106 = vand.u32 %v80, 4294901760
    %1107 = vmatpush1.msra.mxu0 %v1106
    %1108 = vmatprep.subr.mxu0 0.0
    %v1109 = vand.u32 %v81, 4294901760
    %1110 = vmatpush1.msra.mxu0 %v1109
    %1111 = vmatprep.subr.mxu0 0.0
    %v1112 = vand.u32 %v82, 4294901760
    %1113 = vmatpush1.msra.mxu0 %v1112
    %1114 = vmatprep.subr.mxu0 0.0
    %v1115 = vand.u32 %v83, 4294901760
    %1116 = vmatpush1.msra.mxu0 %v1115
    %1117 = vmatprep.subr.mxu0 0.0
    %v1118 = vand.u32 %v84, 4294901760
    %1119 = vmatpush1.msra.mxu0 %v1118
    %1120 = vmatprep.subr.mxu0 0.0
    %v1121 = vand.u32 %v85, 4294901760
    %1122 = vmatpush1.msra.mxu0 %v1121
    %1123 = vmatprep.subr.mxu0 0.0
    %v1124 = vand.u32 %v86, 4294901760
    %1125 = vmatpush1.msra.mxu0 %v1124
    %1126 = vmatprep.subr.mxu0 0.0
    %v1127 = vand.u32 %v87, 4294901760
    %1128 = vmatpush1.msra.mxu0 %v1127
    %1129 = vmatprep.subr.mxu0 0.0
    %v1130 = vand.u32 %v88, 4294901760
    %1131 = vmatpush1.msra.mxu0 %v1130
    %1132 = vmatprep.subr.mxu0 0.0
    %v1133 = vand.u32 %v89, 4294901760
    %1134 = vmatpush1.msra.mxu0 %v1133
    %1135 = vmatprep.subr.mxu0 0.0
    %v1136 = vand.u32 %v90, 4294901760
    %1137 = vmatpush1.msra.mxu0 %v1136
    %1138 = vmatprep.subr.mxu0 0.0
    %v1139 = vand.u32 %v91, 4294901760
    %1140 = vmatpush1.msra.mxu0 %v1139
    %1141 = vmatprep.subr.mxu0 0.0
    %v1142 = vand.u32 %v92, 4294901760
    %1143 = vmatpush1.msra.mxu0 %v1142
    %1144 = vmatprep.subr.mxu0 0.0
    %1145 = vmatpush1.msra.mxu0 0.0
    %1146 = vmatprep.subr.mxu0 0.0
    %1147 = vmatpush1.msra.mxu0 0.0
    %1148 = vmatprep.subr.mxu0 0.0
    %1149 = vmatpush1.msra.mxu0 0.0
    %1150 = vmatprep.subr.mxu0 0.0
    %1151 = vmatpush1.msra.mxu0 0.0
    %1152 = vmatprep.subr.mxu0 0.0
    %1153 = vmatpush1.msra.mxu0 0.0
    %1154 = vmatprep.subr.mxu0 0.0
    %1155 = vmatpush1.msra.mxu0 0.0
    %1156 = vmatprep.subr.mxu0 0.0
    %1157 = vmatpush1.msra.mxu0 0.0
    %1158 = vmatprep.subr.mxu0 0.0
    %1159 = vmatpush1.msra.mxu0 0.0
    %1160 = vmatprep.subr.mxu0 0.0
    %1161 = vmatpush1.msra.mxu0 0.0
    %1162 = vmatprep.subr.mxu0 0.0
    %1163 = vmatpush1.msra.mxu0 0.0
    %1164 = vmatprep.subr.mxu0 0.0
    %1165 = vmatpush1.msra.mxu0 0.0
    %1166 = vmatprep.subr.mxu0 0.0
    %1167 = vmatpush1.msra.mxu0 0.0
    %1168 = vmatprep.subr.mxu0 0.0
    %1169 = vmatpush1.msra.mxu0 0.0
    %1170 = vmatprep.subr.mxu0 0.0
    %1171 = vmatpush1.msra.mxu0 0.0
    %1172 = vmatprep.subr.mxu0 0.0
    %1173 = vmatpush1.msra.mxu0 0.0
    %1174 = vmatprep.subr.mxu0 0.0
    %1175 = vmatpush1.msra.mxu0 0.0
    %1176 = vmatprep.mubr.f32.mxu0 0.0
    %v1177 = vand.u32 %v76, 4294901760
    %v1178 = vsub.f32 %v76, %v1177
    %v1179 = vand.u32 %v1178, 4294901760
    %1180 = vmatmul.mubr.f32.gmra.mrb[0].mxu0 %v1179
    %v1181 = vpop.f32.mrb[0].mxu0
    %v1182 = vadd.f32 %v1093, %v1181
    %v1183 = vpop.f32.mrb[0].mxu0
    %1184 = vdwg.mxu0
    %1185 = vmatprep.subr.mxu0 0.0
    %v1186 = vand.u32 %v77, 4294901760
    %v1187 = vsub.f32 %v77, %v1186
    %v1188 = vand.u32 %v1187, 4294901760
    %1189 = vmatpush1.msra.mxu0 %v1188
    %1190 = vmatprep.subr.mxu0 0.0
    %v1191 = vand.u32 %v78, 4294901760
    %v1192 = vsub.f32 %v78, %v1191
    %v1193 = vand.u32 %v1192, 4294901760
    %1194 = vmatpush1.msra.mxu0 %v1193
    %1195 = vmatprep.subr.mxu0 0.0
    %v1196 = vand.u32 %v79, 4294901760
    %v1197 = vsub.f32 %v79, %v1196
    %v1198 = vand.u32 %v1197, 4294901760
    %1199 = vmatpush1.msra.mxu0 %v1198
    %1200 = vmatprep.subr.mxu0 0.0
    %v1201 = vand.u32 %v80, 4294901760
    %v1202 = vsub.f32 %v80, %v1201
    %v1203 = vand.u32 %v1202, 4294901760
    %1204 = vmatpush1.msra.mxu0 %v1203
    %1205 = vmatprep.subr.mxu0 0.0
    %v1206 = vand.u32 %v81, 4294901760
    %v1207 = vsub.f32 %v81, %v1206
    %v1208 = vand.u32 %v1207, 4294901760
    %1209 = vmatpush1.msra.mxu0 %v1208
    %1210 = vmatprep.subr.mxu0 0.0
    %v1211 = vand.u32 %v82, 4294901760
    %v1212 = vsub.f32 %v82, %v1211
    %v1213 = vand.u32 %v1212, 4294901760
    %1214 = vmatpush1.msra.mxu0 %v1213
    %1215 = vmatprep.subr.mxu0 0.0
    %v1216 = vand.u32 %v83, 4294901760
    %v1217 = vsub.f32 %v83, %v1216
    %v1218 = vand.u32 %v1217, 4294901760
    %1219 = vmatpush1.msra.mxu0 %v1218
    %1220 = vmatprep.subr.mxu0 0.0
    %v1221 = vand.u32 %v84, 4294901760
    %v1222 = vsub.f32 %v84, %v1221
    %v1223 = vand.u32 %v1222, 4294901760
    %1224 = vmatpush1.msra.mxu0 %v1223
    %1225 = vmatprep.subr.mxu0 0.0
    %v1226 = vand.u32 %v85, 4294901760
    %v1227 = vsub.f32 %v85, %v1226
    %v1228 = vand.u32 %v1227, 4294901760
    %1229 = vmatpush1.msra.mxu0 %v1228
    %1230 = vmatprep.subr.mxu0 0.0
    %v1231 = vand.u32 %v86, 4294901760
    %v1232 = vsub.f32 %v86, %v1231
    %v1233 = vand.u32 %v1232, 4294901760
    %1234 = vmatpush1.msra.mxu0 %v1233
    %1235 = vmatprep.subr.mxu0 0.0
    %v1236 = vand.u32 %v87, 4294901760
    %v1237 = vsub.f32 %v87, %v1236
    %v1238 = vand.u32 %v1237, 4294901760
    %1239 = vmatpush1.msra.mxu0 %v1238
    %1240 = vmatprep.subr.mxu0 0.0
    %v1241 = vand.u32 %v88, 4294901760
    %v1242 = vsub.f32 %v88, %v1241
    %v1243 = vand.u32 %v1242, 4294901760
    %1244 = vmatpush1.msra.mxu0 %v1243
    %1245 = vmatprep.subr.mxu0 0.0
    %v1246 = vand.u32 %v89, 4294901760
    %v1247 = vsub.f32 %v89, %v1246
    %v1248 = vand.u32 %v1247, 4294901760
    %1249 = vmatpush1.msra.mxu0 %v1248
    %1250 = vmatprep.subr.mxu0 0.0
    %v1251 = vand.u32 %v90, 4294901760
    %v1252 = vsub.f32 %v90, %v1251
    %v1253 = vand.u32 %v1252, 4294901760
    %1254 = vmatpush1.msra.mxu0 %v1253
    %1255 = vmatprep.subr.mxu0 0.0
    %v1256 = vand.u32 %v91, 4294901760
    %v1257 = vsub.f32 %v91, %v1256
    %v1258 = vand.u32 %v1257, 4294901760
    %1259 = vmatpush1.msra.mxu0 %v1258
    %1260 = vmatprep.subr.mxu0 0.0
    %v1261 = vand.u32 %v92, 4294901760
    %v1262 = vsub.f32 %v92, %v1261
    %v1263 = vand.u32 %v1262, 4294901760
    %1264 = vmatpush1.msra.mxu0 %v1263
    %1265 = vmatprep.subr.mxu0 0.0
    %1266 = vmatpush1.msra.mxu0 0.0
    %1267 = vmatprep.subr.mxu0 0.0
    %1268 = vmatpush1.msra.mxu0 0.0
    %1269 = vmatprep.subr.mxu0 0.0
    %1270 = vmatpush1.msra.mxu0 0.0
    %1271 = vmatprep.subr.mxu0 0.0
    %1272 = vmatpush1.msra.mxu0 0.0
    %1273 = vmatprep.subr.mxu0 0.0
    %1274 = vmatpush1.msra.mxu0 0.0
    %1275 = vmatprep.subr.mxu0 0.0
    %1276 = vmatpush1.msra.mxu0 0.0
    %1277 = vmatprep.subr.mxu0 0.0
    %1278 = vmatpush1.msra.mxu0 0.0
    %1279 = vmatprep.subr.mxu0 0.0
    %1280 = vmatpush1.msra.mxu0 0.0
    %1281 = vmatprep.subr.mxu0 0.0
    %1282 = vmatpush1.msra.mxu0 0.0
    %1283 = vmatprep.subr.mxu0 0.0
    %1284 = vmatpush1.msra.mxu0 0.0
    %1285 = vmatprep.subr.mxu0 0.0
    %1286 = vmatpush1.msra.mxu0 0.0
    %1287 = vmatprep.subr.mxu0 0.0
    %1288 = vmatpush1.msra.mxu0 0.0
    %1289 = vmatprep.subr.mxu0 0.0
    %1290 = vmatpush1.msra.mxu0 0.0
    %1291 = vmatprep.subr.mxu0 0.0
    %1292 = vmatpush1.msra.mxu0 0.0
    %1293 = vmatprep.subr.mxu0 0.0
    %1294 = vmatpush1.msra.mxu0 0.0
    %1295 = vmatprep.subr.mxu0 0.0
    %1296 = vmatpush1.msra.mxu0 0.0
    %1297 = vmatprep.mubr.f32.mxu0 0.0
    %v1298 = vand.u32 %v76, 4294901760
    %1299 = vmatmul.mubr.f32.gmra.mrb[0].mxu0 %v1298
    %v1300 = vpop.f32.mrb[0].mxu0
    %v1301 = vadd.f32 %v1182, %v1300
    %v1302 = vpop.f32.mrb[0].mxu0
    %1303 = vdwg.mxu0
    %1304 = vmatprep.subr.mxu0 0.0
    %v1305 = vand.u32 %v77, 4294901760
    %1306 = vmatpush1.msra.mxu0 %v1305
    %1307 = vmatprep.subr.mxu0 0.0
    %v1308 = vand.u32 %v78, 4294901760
    %1309 = vmatpush1.msra.mxu0 %v1308
    %1310 = vmatprep.subr.mxu0 0.0
    %v1311 = vand.u32 %v79, 4294901760
    %1312 = vmatpush1.msra.mxu0 %v1311
    %1313 = vmatprep.subr.mxu0 0.0
    %v1314 = vand.u32 %v80, 4294901760
    %1315 = vmatpush1.msra.mxu0 %v1314
    %1316 = vmatprep.subr.mxu0 0.0
    %v1317 = vand.u32 %v81, 4294901760
    %1318 = vmatpush1.msra.mxu0 %v1317
    %1319 = vmatprep.subr.mxu0 0.0
    %v1320 = vand.u32 %v82, 4294901760
    %1321 = vmatpush1.msra.mxu0 %v1320
    %1322 = vmatprep.subr.mxu0 0.0
    %v1323 = vand.u32 %v83, 4294901760
    %1324 = vmatpush1.msra.mxu0 %v1323
    %1325 = vmatprep.subr.mxu0 0.0
    %v1326 = vand.u32 %v84, 4294901760
    %1327 = vmatpush1.msra.mxu0 %v1326
    %1328 = vmatprep.subr.mxu0 0.0
    %v1329 = vand.u32 %v85, 4294901760
    %1330 = vmatpush1.msra.mxu0 %v1329
    %1331 = vmatprep.subr.mxu0 0.0
    %v1332 = vand.u32 %v86, 4294901760
    %1333 = vmatpush1.msra.mxu0 %v1332
    %1334 = vmatprep.subr.mxu0 0.0
    %v1335 = vand.u32 %v87, 4294901760
    %1336 = vmatpush1.msra.mxu0 %v1335
    %1337 = vmatprep.subr.mxu0 0.0
    %v1338 = vand.u32 %v88, 4294901760
    %1339 = vmatpush1.msra.mxu0 %v1338
    %1340 = vmatprep.subr.mxu0 0.0
    %v1341 = vand.u32 %v89, 4294901760
    %1342 = vmatpush1.msra.mxu0 %v1341
    %1343 = vmatprep.subr.mxu0 0.0
    %v1344 = vand.u32 %v90, 4294901760
    %1345 = vmatpush1.msra.mxu0 %v1344
    %1346 = vmatprep.subr.mxu0 0.0
    %v1347 = vand.u32 %v91, 4294901760
    %1348 = vmatpush1.msra.mxu0 %v1347
    %1349 = vmatprep.subr.mxu0 0.0
    %v1350 = vand.u32 %v92, 4294901760
    %1351 = vmatpush1.msra.mxu0 %v1350
    %1352 = vmatprep.subr.mxu0 0.0
    %1353 = vmatpush1.msra.mxu0 0.0
    %1354 = vmatprep.subr.mxu0 0.0
    %1355 = vmatpush1.msra.mxu0 0.0
    %1356 = vmatprep.subr.mxu0 0.0
    %1357 = vmatpush1.msra.mxu0 0.0
    %1358 = vmatprep.subr.mxu0 0.0
    %1359 = vmatpush1.msra.mxu0 0.0
    %1360 = vmatprep.subr.mxu0 0.0
    %1361 = vmatpush1.msra.mxu0 0.0
    %1362 = vmatprep.subr.mxu0 0.0
    %1363 = vmatpush1.msra.mxu0 0.0
    %1364 = vmatprep.subr.mxu0 0.0
    %1365 = vmatpush1.msra.mxu0 0.0
    %1366 = vmatprep.subr.mxu0 0.0
    %1367 = vmatpush1.msra.mxu0 0.0
    %1368 = vmatprep.subr.mxu0 0.0
    %1369 = vmatpush1.msra.mxu0 0.0
    %1370 = vmatprep.subr.mxu0 0.0
    %1371 = vmatpush1.msra.mxu0 0.0
    %1372 = vmatprep.subr.mxu0 0.0
    %1373 = vmatpush1.msra.mxu0 0.0
    %1374 = vmatprep.subr.mxu0 0.0
    %1375 = vmatpush1.msra.mxu0 0.0
    %1376 = vmatprep.subr.mxu0 0.0
    %1377 = vmatpush1.msra.mxu0 0.0
    %1378 = vmatprep.subr.mxu0 0.0
    %1379 = vmatpush1.msra.mxu0 0.0
    %1380 = vmatprep.subr.mxu0 0.0
    %1381 = vmatpush1.msra.mxu0 0.0
    %1382 = vmatprep.subr.mxu0 0.0
    %1383 = vmatpush1.msra.mxu0 0.0
    %1384 = vmatprep.mubr.f32.mxu0 0.0
    %v1385 = vand.u32 %v76, 4294901760
    %1386 = vmatmul.mubr.f32.gmra.mrb[0].mxu0 %v1385
    %v1387 = vpop.f32.mrb[0].mxu0
    %v1388 = vadd.f32 %v1301, %v1387
    %v1389 = vpop.f32.mrb[0].mxu0
    %1390 = vdwg.mxu0
    %v1391 = vld [vmem:[%s4] sm:$0x1]
    %v1393 = vlaneseq
    %v1394 = vshrl.u32 %v1393, 7
    %v1395 = vsub.s32 0, %v1394
    %v1396 = vrot.slane %v1391, %v1395
    %v1398 = vadd.f32 %v1388, %v1396
    %v1399 = vtanh.pop %v1398
    %1400 = vst [vmem:[#allocation2] sm:$0xff] %v1399
    %v1401 = vld [vmem:[#allocation7] sm:$0xff]
    %v1402 = vld [vmem:[#allocation7 + $0x8] sm:$0xff]
    %v1403 = vld [vmem:[#allocation7 + $0x10] sm:$0xff]
    %v1404 = vld [vmem:[#allocation7 + $0x18] sm:$0xff]
    %v1405 = vld [vmem:[#allocation7 + $0x20] sm:$0xff]
    %v1406 = vld [vmem:[#allocation7 + $0x28] sm:$0xff]
    %v1407 = vld [vmem:[#allocation7 + $0x30] sm:$0xff]
    %v1408 = vld [vmem:[#allocation7 + $0x38] sm:$0xff]
    %v1409 = vld [vmem:[#allocation7 + $0x40] sm:$0xff]
    %v1410 = vld [vmem:[#allocation7 + $0x48] sm:$0xff]
    %v1411 = vld [vmem:[#allocation7 + $0x50] sm:$0xff]
    %v1412 = vld [vmem:[#allocation7 + $0x58] sm:$0xff]
    %v1413 = vld [vmem:[#allocation7 + $0x60] sm:$0xff]
    %v1414 = vld [vmem:[#allocation7 + $0x68] sm:$0xff]
    %v1415 = vld [vmem:[#allocation7 + $0x70] sm:$0xff]
    %v1416 = vld [vmem:[#allocation7 + $0x78] sm:$0xff]
    %v1417 = vld [vmem:[%s6] sm:$0x1]
    %v1419 = vlaneseq
    %v1420 = vshrl.u32 %v1419, 7
    %v1421 = vsub.s32 0, %v1420
    %v1422 = vrot.slane %v1417, %v1421
    %1424 = vmatprep.subr.mxu0 0.0
    %v1425 = vand.u32 %v1401, 4294901760
    %1426 = vmatpush1.msra.mxu0 %v1425
    %1427 = vmatprep.subr.mxu0 0.0
    %v1428 = vand.u32 %v1402, 4294901760
    %1429 = vmatpush1.msra.mxu0 %v1428
    %1430 = vmatprep.subr.mxu0 0.0
    %v1431 = vand.u32 %v1403, 4294901760
    %1432 = vmatpush1.msra.mxu0 %v1431
    %1433 = vmatprep.subr.mxu0 0.0
    %v1434 = vand.u32 %v1404, 4294901760
    %1435 = vmatpush1.msra.mxu0 %v1434
    %1436 = vmatprep.subr.mxu0 0.0
    %v1437 = vand.u32 %v1405, 4294901760
    %1438 = vmatpush1.msra.mxu0 %v1437
    %1439 = vmatprep.subr.mxu0 0.0
    %v1440 = vand.u32 %v1406, 4294901760
    %1441 = vmatpush1.msra.mxu0 %v1440
    %1442 = vmatprep.subr.mxu0 0.0
    %v1443 = vand.u32 %v1407, 4294901760
    %1444 = vmatpush1.msra.mxu0 %v1443
    %1445 = vmatprep.subr.mxu0 0.0
    %v1446 = vand.u32 %v1408, 4294901760
    %1447 = vmatpush1.msra.mxu0 %v1446
    %1448 = vmatprep.subr.mxu0 0.0
    %v1449 = vand.u32 %v1409, 4294901760
    %1450 = vmatpush1.msra.mxu0 %v1449
    %1451 = vmatprep.subr.mxu0 0.0
    %v1452 = vand.u32 %v1410, 4294901760
    %1453 = vmatpush1.msra.mxu0 %v1452
    %1454 = vmatprep.subr.mxu0 0.0
    %v1455 = vand.u32 %v1411, 4294901760
    %1456 = vmatpush1.msra.mxu0 %v1455
    %1457 = vmatprep.subr.mxu0 0.0
    %v1458 = vand.u32 %v1412, 4294901760
    %1459 = vmatpush1.msra.mxu0 %v1458
    %1460 = vmatprep.subr.mxu0 0.0
    %v1461 = vand.u32 %v1413, 4294901760
    %1462 = vmatpush1.msra.mxu0 %v1461
    %1463 = vmatprep.subr.mxu0 0.0
    %v1464 = vand.u32 %v1414, 4294901760
    %1465 = vmatpush1.msra.mxu0 %v1464
    %1466 = vmatprep.subr.mxu0 0.0
    %v1467 = vand.u32 %v1415, 4294901760
    %1468 = vmatpush1.msra.mxu0 %v1467
    %1469 = vmatprep.subr.mxu0 0.0
    %v1470 = vand.u32 %v1416, 4294901760
    %1471 = vmatpush1.msra.mxu0 %v1470
    %1472 = vmatprep.subr.mxu0 0.0
    %1473 = vmatpush1.msra.mxu0 0.0
    %1474 = vmatprep.subr.mxu0 0.0
    %1475 = vmatpush1.msra.mxu0 0.0
    %1476 = vmatprep.subr.mxu0 0.0
    %1477 = vmatpush1.msra.mxu0 0.0
    %1478 = vmatprep.subr.mxu0 0.0
    %1479 = vmatpush1.msra.mxu0 0.0
    %1480 = vmatprep.subr.mxu0 0.0
    %1481 = vmatpush1.msra.mxu0 0.0
    %1482 = vmatprep.subr.mxu0 0.0
    %1483 = vmatpush1.msra.mxu0 0.0
    %1484 = vmatprep.subr.mxu0 0.0
    %1485 = vmatpush1.msra.mxu0 0.0
    %1486 = vmatprep.subr.mxu0 0.0
    %1487 = vmatpush1.msra.mxu0 0.0
    %1488 = vmatprep.subr.mxu0 0.0
    %1489 = vmatpush1.msra.mxu0 0.0
    %1490 = vmatprep.subr.mxu0 0.0
    %1491 = vmatpush1.msra.mxu0 0.0
    %1492 = vmatprep.subr.mxu0 0.0
    %1493 = vmatpush1.msra.mxu0 0.0
    %1494 = vmatprep.subr.mxu0 0.0
    %1495 = vmatpush1.msra.mxu0 0.0
    %1496 = vmatprep.subr.mxu0 0.0
    %1497 = vmatpush1.msra.mxu0 0.0
    %1498 = vmatprep.subr.mxu0 0.0
    %1499 = vmatpush1.msra.mxu0 0.0
    %1500 = vmatprep.subr.mxu0 0.0
    %1501 = vmatpush1.msra.mxu0 0.0
    %1502 = vmatprep.subr.mxu0 0.0
    %1503 = vmatpush1.msra.mxu0 0.0
    %1504 = vmatprep.mubr.f32.mxu0 0.0
    %v1505 = vand.u32 %v1399, 4294901760
    %v1506 = vsub.f32 %v1399, %v1505
    %v1507 = vand.u32 %v1506, 4294901760
    %v1508 = vsub.f32 %v1506, %v1507
    %v1509 = vand.u32 %v1508, 4294901760
    %1510 = vmatmul.mubr.f32.gmra.mrb[0].mxu0 %v1509
    %v1511 = vpop.f32.mrb[0].mxu0
    %v1512 = vadd.f32 %v1422, %v1511
    %v1513 = vpop.f32.mrb[0].mxu0
    %1514 = vdwg.mxu0
    %1515 = vmatprep.subr.mxu0 0.0
    %v1516 = vand.u32 %v1401, 4294901760
    %v1517 = vsub.f32 %v1401, %v1516
    %v1518 = vand.u32 %v1517, 4294901760
    %v1519 = vsub.f32 %v1517, %v1518
    %v1520 = vand.u32 %v1519, 4294901760
    %1521 = vmatpush1.msra.mxu0 %v1520
    %1522 = vmatprep.subr.mxu0 0.0
    %v1523 = vand.u32 %v1402, 4294901760
    %v1524 = vsub.f32 %v1402, %v1523
    %v1525 = vand.u32 %v1524, 4294901760
    %v1526 = vsub.f32 %v1524, %v1525
    %v1527 = vand.u32 %v1526, 4294901760
    %1528 = vmatpush1.msra.mxu0 %v1527
    %1529 = vmatprep.subr.mxu0 0.0
    %v1530 = vand.u32 %v1403, 4294901760
    %v1531 = vsub.f32 %v1403, %v1530
    %v1532 = vand.u32 %v1531, 4294901760
    %v1533 = vsub.f32 %v1531, %v1532
    %v1534 = vand.u32 %v1533, 4294901760
    %1535 = vmatpush1.msra.mxu0 %v1534
    %1536 = vmatprep.subr.mxu0 0.0
    %v1537 = vand.u32 %v1404, 4294901760
    %v1538 = vsub.f32 %v1404, %v1537
    %v1539 = vand.u32 %v1538, 4294901760
    %v1540 = vsub.f32 %v1538, %v1539
    %v1541 = vand.u32 %v1540, 4294901760
    %1542 = vmatpush1.msra.mxu0 %v1541
    %1543 = vmatprep.subr.mxu0 0.0
    %v1544 = vand.u32 %v1405, 4294901760
    %v1545 = vsub.f32 %v1405, %v1544
    %v1546 = vand.u32 %v1545, 4294901760
    %v1547 = vsub.f32 %v1545, %v1546
    %v1548 = vand.u32 %v1547, 4294901760
    %1549 = vmatpush1.msra.mxu0 %v1548
    %1550 = vmatprep.subr.mxu0 0.0
    %v1551 = vand.u32 %v1406, 4294901760
    %v1552 = vsub.f32 %v1406, %v1551
    %v1553 = vand.u32 %v1552, 4294901760
    %v1554 = vsub.f32 %v1552, %v1553
    %v1555 = vand.u32 %v1554, 4294901760
    %1556 = vmatpush1.msra.mxu0 %v1555
    %1557 = vmatprep.subr.mxu0 0.0
    %v1558 = vand.u32 %v1407, 4294901760
    %v1559 = vsub.f32 %v1407, %v1558
    %v1560 = vand.u32 %v1559, 4294901760
    %v1561 = vsub.f32 %v1559, %v1560
    %v1562 = vand.u32 %v1561, 4294901760
    %1563 = vmatpush1.msra.mxu0 %v1562
    %1564 = vmatprep.subr.mxu0 0.0
    %v1565 = vand.u32 %v1408, 4294901760
    %v1566 = vsub.f32 %v1408, %v1565
    %v1567 = vand.u32 %v1566, 4294901760
    %v1568 = vsub.f32 %v1566, %v1567
    %v1569 = vand.u32 %v1568, 4294901760
    %1570 = vmatpush1.msra.mxu0 %v1569
    %1571 = vmatprep.subr.mxu0 0.0
    %v1572 = vand.u32 %v1409, 4294901760
    %v1573 = vsub.f32 %v1409, %v1572
    %v1574 = vand.u32 %v1573, 4294901760
    %v1575 = vsub.f32 %v1573, %v1574
    %v1576 = vand.u32 %v1575, 4294901760
    %1577 = vmatpush1.msra.mxu0 %v1576
    %1578 = vmatprep.subr.mxu0 0.0
    %v1579 = vand.u32 %v1410, 4294901760
    %v1580 = vsub.f32 %v1410, %v1579
    %v1581 = vand.u32 %v1580, 4294901760
    %v1582 = vsub.f32 %v1580, %v1581
    %v1583 = vand.u32 %v1582, 4294901760
    %1584 = vmatpush1.msra.mxu0 %v1583
    %1585 = vmatprep.subr.mxu0 0.0
    %v1586 = vand.u32 %v1411, 4294901760
    %v1587 = vsub.f32 %v1411, %v1586
    %v1588 = vand.u32 %v1587, 4294901760
    %v1589 = vsub.f32 %v1587, %v1588
    %v1590 = vand.u32 %v1589, 4294901760
    %1591 = vmatpush1.msra.mxu0 %v1590
    %1592 = vmatprep.subr.mxu0 0.0
    %v1593 = vand.u32 %v1412, 4294901760
    %v1594 = vsub.f32 %v1412, %v1593
    %v1595 = vand.u32 %v1594, 4294901760
    %v1596 = vsub.f32 %v1594, %v1595
    %v1597 = vand.u32 %v1596, 4294901760
    %1598 = vmatpush1.msra.mxu0 %v1597
    %1599 = vmatprep.subr.mxu0 0.0
    %v1600 = vand.u32 %v1413, 4294901760
    %v1601 = vsub.f32 %v1413, %v1600
    %v1602 = vand.u32 %v1601, 4294901760
    %v1603 = vsub.f32 %v1601, %v1602
    %v1604 = vand.u32 %v1603, 4294901760
    %1605 = vmatpush1.msra.mxu0 %v1604
    %1606 = vmatprep.subr.mxu0 0.0
    %v1607 = vand.u32 %v1414, 4294901760
    %v1608 = vsub.f32 %v1414, %v1607
    %v1609 = vand.u32 %v1608, 4294901760
    %v1610 = vsub.f32 %v1608, %v1609
    %v1611 = vand.u32 %v1610, 4294901760
    %1612 = vmatpush1.msra.mxu0 %v1611
    %1613 = vmatprep.subr.mxu0 0.0
    %v1614 = vand.u32 %v1415, 4294901760
    %v1615 = vsub.f32 %v1415, %v1614
    %v1616 = vand.u32 %v1615, 4294901760
    %v1617 = vsub.f32 %v1615, %v1616
    %v1618 = vand.u32 %v1617, 4294901760
    %1619 = vmatpush1.msra.mxu0 %v1618
    %1620 = vmatprep.subr.mxu0 0.0
    %v1621 = vand.u32 %v1416, 4294901760
    %v1622 = vsub.f32 %v1416, %v1621
    %v1623 = vand.u32 %v1622, 4294901760
    %v1624 = vsub.f32 %v1622, %v1623
    %v1625 = vand.u32 %v1624, 4294901760
    %1626 = vmatpush1.msra.mxu0 %v1625
    %1627 = vmatprep.subr.mxu0 0.0
    %1628 = vmatpush1.msra.mxu0 0.0
    %1629 = vmatprep.subr.mxu0 0.0
    %1630 = vmatpush1.msra.mxu0 0.0
    %1631 = vmatprep.subr.mxu0 0.0
    %1632 = vmatpush1.msra.mxu0 0.0
    %1633 = vmatprep.subr.mxu0 0.0
    %1634 = vmatpush1.msra.mxu0 0.0
    %1635 = vmatprep.subr.mxu0 0.0
    %1636 = vmatpush1.msra.mxu0 0.0
    %1637 = vmatprep.subr.mxu0 0.0
    %1638 = vmatpush1.msra.mxu0 0.0
    %1639 = vmatprep.subr.mxu0 0.0
    %1640 = vmatpush1.msra.mxu0 0.0
    %1641 = vmatprep.subr.mxu0 0.0
    %1642 = vmatpush1.msra.mxu0 0.0
    %1643 = vmatprep.subr.mxu0 0.0
    %1644 = vmatpush1.msra.mxu0 0.0
    %1645 = vmatprep.subr.mxu0 0.0
    %1646 = vmatpush1.msra.mxu0 0.0
    %1647 = vmatprep.subr.mxu0 0.0
    %1648 = vmatpush1.msra.mxu0 0.0
    %1649 = vmatprep.subr.mxu0 0.0
    %1650 = vmatpush1.msra.mxu0 0.0
    %1651 = vmatprep.subr.mxu0 0.0
    %1652 = vmatpush1.msra.mxu0 0.0
    %1653 = vmatprep.subr.mxu0 0.0
    %1654 = vmatpush1.msra.mxu0 0.0
    %1655 = vmatprep.subr.mxu0 0.0
    %1656 = vmatpush1.msra.mxu0 0.0
    %1657 = vmatprep.subr.mxu0 0.0
    %1658 = vmatpush1.msra.mxu0 0.0
    %1659 = vmatprep.mubr.f32.mxu0 0.0
    %v1660 = vand.u32 %v1399, 4294901760
    %1661 = vmatmul.mubr.f32.gmra.mrb[0].mxu0 %v1660
    %v1662 = vpop.f32.mrb[0].mxu0
    %v1663 = vadd.f32 %v1512, %v1662
    %v1664 = vpop.f32.mrb[0].mxu0
    %1665 = vdwg.mxu0
    %1666 = vmatprep.subr.mxu0 0.0
    %v1667 = vand.u32 %v1401, 4294901760
    %v1668 = vsub.f32 %v1401, %v1667
    %1669 = vmatpush1.msra.mxu0 %v1668
    %1670 = vmatprep.subr.mxu0 0.0
    %v1671 = vand.u32 %v1402, 4294901760
    %v1672 = vsub.f32 %v1402, %v1671
    %1673 = vmatpush1.msra.mxu0 %v1672
    %1674 = vmatprep.subr.mxu0 0.0
    %v1675 = vand.u32 %v1403, 4294901760
    %v1676 = vsub.f32 %v1403, %v1675
    %1677 = vmatpush1.msra.mxu0 %v1676
    %1678 = vmatprep.subr.mxu0 0.0
    %v1679 = vand.u32 %v1404, 4294901760
    %v1680 = vsub.f32 %v1404, %v1679
    %1681 = vmatpush1.msra.mxu0 %v1680
    %1682 = vmatprep.subr.mxu0 0.0
    %v1683 = vand.u32 %v1405, 4294901760
    %v1684 = vsub.f32 %v1405, %v1683
    %1685 = vmatpush1.msra.mxu0 %v1684
    %1686 = vmatprep.subr.mxu0 0.0
    %v1687 = vand.u32 %v1406, 4294901760
    %v1688 = vsub.f32 %v1406, %v1687
    %1689 = vmatpush1.msra.mxu0 %v1688
    %1690 = vmatprep.subr.mxu0 0.0
    %v1691 = vand.u32 %v1407, 4294901760
    %v1692 = vsub.f32 %v1407, %v1691
    %1693 = vmatpush1.msra.mxu0 %v1692
    %1694 = vmatprep.subr.mxu0 0.0
    %v1695 = vand.u32 %v1408, 4294901760
    %v1696 = vsub.f32 %v1408, %v1695
    %1697 = vmatpush1.msra.mxu0 %v1696
    %1698 = vmatprep.subr.mxu0 0.0
    %v1699 = vand.u32 %v1409, 4294901760
    %v1700 = vsub.f32 %v1409, %v1699
    %1701 = vmatpush1.msra.mxu0 %v1700
    %1702 = vmatprep.subr.mxu0 0.0
    %v1703 = vand.u32 %v1410, 4294901760
    %v1704 = vsub.f32 %v1410, %v1703
    %1705 = vmatpush1.msra.mxu0 %v1704
    %1706 = vmatprep.subr.mxu0 0.0
    %v1707 = vand.u32 %v1411, 4294901760
    %v1708 = vsub.f32 %v1411, %v1707
    %1709 = vmatpush1.msra.mxu0 %v1708
    %1710 = vmatprep.subr.mxu0 0.0
    %v1711 = vand.u32 %v1412, 4294901760
    %v1712 = vsub.f32 %v1412, %v1711
    %1713 = vmatpush1.msra.mxu0 %v1712
    %1714 = vmatprep.subr.mxu0 0.0
    %v1715 = vand.u32 %v1413, 4294901760
    %v1716 = vsub.f32 %v1413, %v1715
    %1717 = vmatpush1.msra.mxu0 %v1716
    %1718 = vmatprep.subr.mxu0 0.0
    %v1719 = vand.u32 %v1414, 4294901760
    %v1720 = vsub.f32 %v1414, %v1719
    %1721 = vmatpush1.msra.mxu0 %v1720
    %1722 = vmatprep.subr.mxu0 0.0
    %v1723 = vand.u32 %v1415, 4294901760
    %v1724 = vsub.f32 %v1415, %v1723
    %1725 = vmatpush1.msra.mxu0 %v1724
    %1726 = vmatprep.subr.mxu0 0.0
    %v1727 = vand.u32 %v1416, 4294901760
    %v1728 = vsub.f32 %v1416, %v1727
    %1729 = vmatpush1.msra.mxu0 %v1728
    %1730 = vmatprep.subr.mxu0 0.0
    %1731 = vmatpush1.msra.mxu0 0.0
    %1732 = vmatprep.subr.mxu0 0.0
    %1733 = vmatpush1.msra.mxu0 0.0
    %1734 = vmatprep.subr.mxu0 0.0
    %1735 = vmatpush1.msra.mxu0 0.0
    %1736 = vmatprep.subr.mxu0 0.0
    %1737 = vmatpush1.msra.mxu0 0.0
    %1738 = vmatprep.subr.mxu0 0.0
    %1739 = vmatpush1.msra.mxu0 0.0
    %1740 = vmatprep.subr.mxu0 0.0
    %1741 = vmatpush1.msra.mxu0 0.0
    %1742 = vmatprep.subr.mxu0 0.0
    %1743 = vmatpush1.msra.mxu0 0.0
    %1744 = vmatprep.subr.mxu0 0.0
    %1745 = vmatpush1.msra.mxu0 0.0
    %1746 = vmatprep.subr.mxu0 0.0
    %1747 = vmatpush1.msra.mxu0 0.0
    %1748 = vmatprep.subr.mxu0 0.0
    %1749 = vmatpush1.msra.mxu0 0.0
    %1750 = vmatprep.subr.mxu0 0.0
    %1751 = vmatpush1.msra.mxu0 0.0
    %1752 = vmatprep.subr.mxu0 0.0
    %1753 = vmatpush1.msra.mxu0 0.0
    %1754 = vmatprep.subr.mxu0 0.0
    %1755 = vmatpush1.msra.mxu0 0.0
    %1756 = vmatprep.subr.mxu0 0.0
    %1757 = vmatpush1.msra.mxu0 0.0
    %1758 = vmatprep.subr.mxu0 0.0
    %1759 = vmatpush1.msra.mxu0 0.0
    %1760 = vmatprep.subr.mxu0 0.0
    %1761 = vmatpush1.msra.mxu0 0.0
    %1762 = vmatprep.mubr.f32.mxu0 0.0
    %v1763 = vand.u32 %v1399, 4294901760
    %v1764 = vsub.f32 %v1399, %v1763
    %1765 = vmatmul.mubr.f32.gmra.mrb[0].mxu0 %v1764
    %v1766 = vpop.f32.mrb[0].mxu0
    %v1767 = vadd.f32 %v1663, %v1766
    %v1768 = vpop.f32.mrb[0].mxu0
    %1769 = vdwg.mxu0
    %1770 = vmatprep.subr.mxu0 0.0
    %v1771 = vand.u32 %v1401, 4294901760
    %1772 = vmatpush1.msra.mxu0 %v1771
    %1773 = vmatprep.subr.mxu0 0.0
    %v1774 = vand.u32 %v1402, 4294901760
    %1775 = vmatpush1.msra.mxu0 %v1774
    %1776 = vmatprep.subr.mxu0 0.0
    %v1777 = vand.u32 %v1403, 4294901760
    %1778 = vmatpush1.msra.mxu0 %v1777
    %1779 = vmatprep.subr.mxu0 0.0
    %v1780 = vand.u32 %v1404, 4294901760
    %1781 = vmatpush1.msra.mxu0 %v1780
    %1782 = vmatprep.subr.mxu0 0.0
    %v1783 = vand.u32 %v1405, 4294901760
    %1784 = vmatpush1.msra.mxu0 %v1783
    %1785 = vmatprep.subr.mxu0 0.0
    %v1786 = vand.u32 %v1406, 4294901760
    %1787 = vmatpush1.msra.mxu0 %v1786
    %1788 = vmatprep.subr.mxu0 0.0
    %v1789 = vand.u32 %v1407, 4294901760
    %1790 = vmatpush1.msra.mxu0 %v1789
    %1791 = vmatprep.subr.mxu0 0.0
    %v1792 = vand.u32 %v1408, 4294901760
    %1793 = vmatpush1.msra.mxu0 %v1792
    %1794 = vmatprep.subr.mxu0 0.0
    %v1795 = vand.u32 %v1409, 4294901760
    %1796 = vmatpush1.msra.mxu0 %v1795
    %1797 = vmatprep.subr.mxu0 0.0
    %v1798 = vand.u32 %v1410, 4294901760
    %1799 = vmatpush1.msra.mxu0 %v1798
    %1800 = vmatprep.subr.mxu0 0.0
    %v1801 = vand.u32 %v1411, 4294901760
    %1802 = vmatpush1.msra.mxu0 %v1801
    %1803 = vmatprep.subr.mxu0 0.0
    %v1804 = vand.u32 %v1412, 4294901760
    %1805 = vmatpush1.msra.mxu0 %v1804
    %1806 = vmatprep.subr.mxu0 0.0
    %v1807 = vand.u32 %v1413, 4294901760
    %1808 = vmatpush1.msra.mxu0 %v1807
    %1809 = vmatprep.subr.mxu0 0.0
    %v1810 = vand.u32 %v1414, 4294901760
    %1811 = vmatpush1.msra.mxu0 %v1810
    %1812 = vmatprep.subr.mxu0 0.0
    %v1813 = vand.u32 %v1415, 4294901760
    %1814 = vmatpush1.msra.mxu0 %v1813
    %1815 = vmatprep.subr.mxu0 0.0
    %v1816 = vand.u32 %v1416, 4294901760
    %1817 = vmatpush1.msra.mxu0 %v1816
    %1818 = vmatprep.subr.mxu0 0.0
    %1819 = vmatpush1.msra.mxu0 0.0
    %1820 = vmatprep.subr.mxu0 0.0
    %1821 = vmatpush1.msra.mxu0 0.0
    %1822 = vmatprep.subr.mxu0 0.0
    %1823 = vmatpush1.msra.mxu0 0.0
    %1824 = vmatprep.subr.mxu0 0.0
    %1825 = vmatpush1.msra.mxu0 0.0
    %1826 = vmatprep.subr.mxu0 0.0
    %1827 = vmatpush1.msra.mxu0 0.0
    %1828 = vmatprep.subr.mxu0 0.0
    %1829 = vmatpush1.msra.mxu0 0.0
    %1830 = vmatprep.subr.mxu0 0.0
    %1831 = vmatpush1.msra.mxu0 0.0
    %1832 = vmatprep.subr.mxu0 0.0
    %1833 = vmatpush1.msra.mxu0 0.0
    %1834 = vmatprep.subr.mxu0 0.0
    %1835 = vmatpush1.msra.mxu0 0.0
    %1836 = vmatprep.subr.mxu0 0.0
    %1837 = vmatpush1.msra.mxu0 0.0
    %1838 = vmatprep.subr.mxu0 0.0
    %1839 = vmatpush1.msra.mxu0 0.0
    %1840 = vmatprep.subr.mxu0 0.0
    %1841 = vmatpush1.msra.mxu0 0.0
    %1842 = vmatprep.subr.mxu0 0.0
    %1843 = vmatpush1.msra.mxu0 0.0
    %1844 = vmatprep.subr.mxu0 0.0
    %1845 = vmatpush1.msra.mxu0 0.0
    %1846 = vmatprep.subr.mxu0 0.0
    %1847 = vmatpush1.msra.mxu0 0.0
    %1848 = vmatprep.subr.mxu0 0.0
    %1849 = vmatpush1.msra.mxu0 0.0
    %1850 = vmatprep.mubr.f32.mxu0 0.0
    %v1851 = vand.u32 %v1399, 4294901760
    %v1852 = vsub.f32 %v1399, %v1851
    %v1853 = vand.u32 %v1852, 4294901760
    %1854 = vmatmul.mubr.f32.gmra.mrb[0].mxu0 %v1853
    %v1855 = vpop.f32.mrb[0].mxu0
    %v1856 = vadd.f32 %v1767, %v1855
    %v1857 = vpop.f32.mrb[0].mxu0
    %1858 = vdwg.mxu0
    %1859 = vmatprep.subr.mxu0 0.0
    %v1860 = vand.u32 %v1401, 4294901760
    %v1861 = vsub.f32 %v1401, %v1860
    %v1862 = vand.u32 %v1861, 4294901760
    %1863 = vmatpush1.msra.mxu0 %v1862
    %1864 = vmatprep.subr.mxu0 0.0
    %v1865 = vand.u32 %v1402, 4294901760
    %v1866 = vsub.f32 %v1402, %v1865
    %v1867 = vand.u32 %v1866, 4294901760
    %1868 = vmatpush1.msra.mxu0 %v1867
    %1869 = vmatprep.subr.mxu0 0.0
    %v1870 = vand.u32 %v1403, 4294901760
    %v1871 = vsub.f32 %v1403, %v1870
    %v1872 = vand.u32 %v1871, 4294901760
    %1873 = vmatpush1.msra.mxu0 %v1872
    %1874 = vmatprep.subr.mxu0 0.0
    %v1875 = vand.u32 %v1404, 4294901760
    %v1876 = vsub.f32 %v1404, %v1875
    %v1877 = vand.u32 %v1876, 4294901760
    %1878 = vmatpush1.msra.mxu0 %v1877
    %1879 = vmatprep.subr.mxu0 0.0
    %v1880 = vand.u32 %v1405, 4294901760
    %v1881 = vsub.f32 %v1405, %v1880
    %v1882 = vand.u32 %v1881, 4294901760
    %1883 = vmatpush1.msra.mxu0 %v1882
    %1884 = vmatprep.subr.mxu0 0.0
    %v1885 = vand.u32 %v1406, 4294901760
    %v1886 = vsub.f32 %v1406, %v1885
    %v1887 = vand.u32 %v1886, 4294901760
    %1888 = vmatpush1.msra.mxu0 %v1887
    %1889 = vmatprep.subr.mxu0 0.0
    %v1890 = vand.u32 %v1407, 4294901760
    %v1891 = vsub.f32 %v1407, %v1890
    %v1892 = vand.u32 %v1891, 4294901760
    %1893 = vmatpush1.msra.mxu0 %v1892
    %1894 = vmatprep.subr.mxu0 0.0
    %v1895 = vand.u32 %v1408, 4294901760
    %v1896 = vsub.f32 %v1408, %v1895
    %v1897 = vand.u32 %v1896, 4294901760
    %1898 = vmatpush1.msra.mxu0 %v1897
    %1899 = vmatprep.subr.mxu0 0.0
    %v1900 = vand.u32 %v1409, 4294901760
    %v1901 = vsub.f32 %v1409, %v1900
    %v1902 = vand.u32 %v1901, 4294901760
    %1903 = vmatpush1.msra.mxu0 %v1902
    %1904 = vmatprep.subr.mxu0 0.0
    %v1905 = vand.u32 %v1410, 4294901760
    %v1906 = vsub.f32 %v1410, %v1905
    %v1907 = vand.u32 %v1906, 4294901760
    %1908 = vmatpush1.msra.mxu0 %v1907
    %1909 = vmatprep.subr.mxu0 0.0
    %v1910 = vand.u32 %v1411, 4294901760
    %v1911 = vsub.f32 %v1411, %v1910
    %v1912 = vand.u32 %v1911, 4294901760
    %1913 = vmatpush1.msra.mxu0 %v1912
    %1914 = vmatprep.subr.mxu0 0.0
    %v1915 = vand.u32 %v1412, 4294901760
    %v1916 = vsub.f32 %v1412, %v1915
    %v1917 = vand.u32 %v1916, 4294901760
    %1918 = vmatpush1.msra.mxu0 %v1917
    %1919 = vmatprep.subr.mxu0 0.0
    %v1920 = vand.u32 %v1413, 4294901760
    %v1921 = vsub.f32 %v1413, %v1920
    %v1922 = vand.u32 %v1921, 4294901760
    %1923 = vmatpush1.msra.mxu0 %v1922
    %1924 = vmatprep.subr.mxu0 0.0
    %v1925 = vand.u32 %v1414, 4294901760
    %v1926 = vsub.f32 %v1414, %v1925
    %v1927 = vand.u32 %v1926, 4294901760
    %1928 = vmatpush1.msra.mxu0 %v1927
    %1929 = vmatprep.subr.mxu0 0.0
    %v1930 = vand.u32 %v1415, 4294901760
    %v1931 = vsub.f32 %v1415, %v1930
    %v1932 = vand.u32 %v1931, 4294901760
    %1933 = vmatpush1.msra.mxu0 %v1932
    %1934 = vmatprep.subr.mxu0 0.0
    %v1935 = vand.u32 %v1416, 4294901760
    %v1936 = vsub.f32 %v1416, %v1935
    %v1937 = vand.u32 %v1936, 4294901760
    %1938 = vmatpush1.msra.mxu0 %v1937
    %1939 = vmatprep.subr.mxu0 0.0
    %1940 = vmatpush1.msra.mxu0 0.0
    %1941 = vmatprep.subr.mxu0 0.0
    %1942 = vmatpush1.msra.mxu0 0.0
    %1943 = vmatprep.subr.mxu0 0.0
    %1944 = vmatpush1.msra.mxu0 0.0
    %1945 = vmatprep.subr.mxu0 0.0
    %1946 = vmatpush1.msra.mxu0 0.0
    %1947 = vmatprep.subr.mxu0 0.0
    %1948 = vmatpush1.msra.mxu0 0.0
    %1949 = vmatprep.subr.mxu0 0.0
    %1950 = vmatpush1.msra.mxu0 0.0
    %1951 = vmatprep.subr.mxu0 0.0
    %1952 = vmatpush1.msra.mxu0 0.0
    %1953 = vmatprep.subr.mxu0 0.0
    %1954 = vmatpush1.msra.mxu0 0.0
    %1955 = vmatprep.subr.mxu0 0.0
    %1956 = vmatpush1.msra.mxu0 0.0
    %1957 = vmatprep.subr.mxu0 0.0
    %1958 = vmatpush1.msra.mxu0 0.0
    %1959 = vmatprep.subr.mxu0 0.0
    %1960 = vmatpush1.msra.mxu0 0.0
    %1961 = vmatprep.subr.mxu0 0.0
    %1962 = vmatpush1.msra.mxu0 0.0
    %1963 = vmatprep.subr.mxu0 0.0
    %1964 = vmatpush1.msra.mxu0 0.0
    %1965 = vmatprep.subr.mxu0 0.0
    %1966 = vmatpush1.msra.mxu0 0.0
    %1967 = vmatprep.subr.mxu0 0.0
    %1968 = vmatpush1.msra.mxu0 0.0
    %1969 = vmatprep.subr.mxu0 0.0
    %1970 = vmatpush1.msra.mxu0 0.0
    %1971 = vmatprep.mubr.f32.mxu0 0.0
    %v1972 = vand.u32 %v1399, 4294901760
    %1973 = vmatmul.mubr.f32.gmra.mrb[0].mxu0 %v1972
    %v1974 = vpop.f32.mrb[0].mxu0
    %v1975 = vadd.f32 %v1856, %v1974
    %v1976 = vpop.f32.mrb[0].mxu0
    %1977 = vdwg.mxu0
    %1978 = vmatprep.subr.mxu0 0.0
    %v1979 = vand.u32 %v1401, 4294901760
    %1980 = vmatpush1.msra.mxu0 %v1979
    %1981 = vmatprep.subr.mxu0 0.0
    %v1982 = vand.u32 %v1402, 4294901760
    %1983 = vmatpush1.msra.mxu0 %v1982
    %1984 = vmatprep.subr.mxu0 0.0
    %v1985 = vand.u32 %v1403, 4294901760
    %1986 = vmatpush1.msra.mxu0 %v1985
    %1987 = vmatprep.subr.mxu0 0.0
    %v1988 = vand.u32 %v1404, 4294901760
    %1989 = vmatpush1.msra.mxu0 %v1988
    %1990 = vmatprep.subr.mxu0 0.0
    %v1991 = vand.u32 %v1405, 4294901760
    %1992 = vmatpush1.msra.mxu0 %v1991
    %1993 = vmatprep.subr.mxu0 0.0
    %v1994 = vand.u32 %v1406, 4294901760
    %1995 = vmatpush1.msra.mxu0 %v1994
    %1996 = vmatprep.subr.mxu0 0.0
    %v1997 = vand.u32 %v1407, 4294901760
    %1998 = vmatpush1.msra.mxu0 %v1997
    %1999 = vmatprep.subr.mxu0 0.0
    %v2000 = vand.u32 %v1408, 4294901760
    %2001 = vmatpush1.msra.mxu0 %v2000
    %2002 = vmatprep.subr.mxu0 0.0
    %v2003 = vand.u32 %v1409, 4294901760
    %2004 = vmatpush1.msra.mxu0 %v2003
    %2005 = vmatprep.subr.mxu0 0.0
    %v2006 = vand.u32 %v1410, 4294901760
    %2007 = vmatpush1.msra.mxu0 %v2006
    %2008 = vmatprep.subr.mxu0 0.0
    %v2009 = vand.u32 %v1411, 4294901760
    %2010 = vmatpush1.msra.mxu0 %v2009
    %2011 = vmatprep.subr.mxu0 0.0
    %v2012 = vand.u32 %v1412, 4294901760
    %2013 = vmatpush1.msra.mxu0 %v2012
    %2014 = vmatprep.subr.mxu0 0.0
    %v2015 = vand.u32 %v1413, 4294901760
    %2016 = vmatpush1.msra.mxu0 %v2015
    %2017 = vmatprep.subr.mxu0 0.0
    %v2018 = vand.u32 %v1414, 4294901760
    %2019 = vmatpush1.msra.mxu0 %v2018
    %2020 = vmatprep.subr.mxu0 0.0
    %v2021 = vand.u32 %v1415, 4294901760
    %2022 = vmatpush1.msra.mxu0 %v2021
    %2023 = vmatprep.subr.mxu0 0.0
    %v2024 = vand.u32 %v1416, 4294901760
    %2025 = vmatpush1.msra.mxu0 %v2024
    %2026 = vmatprep.subr.mxu0 0.0
    %2027 = vmatpush1.msra.mxu0 0.0
    %2028 = vmatprep.subr.mxu0 0.0
    %2029 = vmatpush1.msra.mxu0 0.0
    %2030 = vmatprep.subr.mxu0 0.0
    %2031 = vmatpush1.msra.mxu0 0.0
    %2032 = vmatprep.subr.mxu0 0.0
    %2033 = vmatpush1.msra.mxu0 0.0
    %2034 = vmatprep.subr.mxu0 0.0
    %2035 = vmatpush1.msra.mxu0 0.0
    %2036 = vmatprep.subr.mxu0 0.0
    %2037 = vmatpush1.msra.mxu0 0.0
    %2038 = vmatprep.subr.mxu0 0.0
    %2039 = vmatpush1.msra.mxu0 0.0
    %2040 = vmatprep.subr.mxu0 0.0
    %2041 = vmatpush1.msra.mxu0 0.0
    %2042 = vmatprep.subr.mxu0 0.0
    %2043 = vmatpush1.msra.mxu0 0.0
    %2044 = vmatprep.subr.mxu0 0.0
    %2045 = vmatpush1.msra.mxu0 0.0
    %2046 = vmatprep.subr.mxu0 0.0
    %2047 = vmatpush1.msra.mxu0 0.0
    %2048 = vmatprep.subr.mxu0 0.0
    %2049 = vmatpush1.msra.mxu0 0.0
    %2050 = vmatprep.subr.mxu0 0.0
    %2051 = vmatpush1.msra.mxu0 0.0
    %2052 = vmatprep.subr.mxu0 0.0
    %2053 = vmatpush1.msra.mxu0 0.0
    %2054 = vmatprep.subr.mxu0 0.0
    %2055 = vmatpush1.msra.mxu0 0.0
    %2056 = vmatprep.subr.mxu0 0.0
    %2057 = vmatpush1.msra.mxu0 0.0
    %2058 = vmatprep.mubr.f32.mxu0 0.0
    %v2059 = vand.u32 %v1399, 4294901760
    %2060 = vmatmul.mubr.f32.gmra.mrb[0].mxu0 %v2059
    %v2061 = vpop.f32.mrb[0].mxu0
    %v2062 = vadd.f32 %v1975, %v2061
    %v2063 = vpop.f32.mrb[0].mxu0
    %2064 = vdwg.mxu0
    %2065 = vst [vmem:[%s7] sm:$0xff] %v2062
    // Predicated region
    $region46: #{rnn_forward_sequence.1} parent=1 // pred_check
      %p2066 = pneg %p69
    $region47: #{rnn_forward_sequence.1} parent=1 // pred_check_branch
      %2068 = sbr.rel (%p2066) target = $region49
    $region48: #{rnn_forward_sequence.1} parent=1 // pred_region
      %2069 = vst [vmem:[%s8] sm:$0xff] %v1399
    $region49: #{rnn_forward_sequence.1} parent=1 // pred_fallthru
      _
    // Predicated region
    $region50: #{rnn_forward_sequence.1} parent=1 // pred_check
      _
    $region51: #{rnn_forward_sequence.1} parent=1 // pred_check_branch
      %2071 = sbr.rel (0) target = $region53
    $region52: #{rnn_forward_sequence.1} parent=1 // pred_region
      _
    $region53: #{rnn_forward_sequence.1} parent=1 // pred_fallthru
      _
    // Predicated region
    $region54: #{rnn_forward_sequence.1} parent=1 // pred_check
      _
    $region55: #{rnn_forward_sequence.1} parent=1 // pred_check_branch
      %2073 = sbr.rel (0) target = $region57
    $region56: #{rnn_forward_sequence.1} parent=1 // pred_region
      _
    $region57: #{rnn_forward_sequence.1} parent=1 // pred_fallthru
      _
    // Predicated region
    $region58: #{rnn_forward_sequence.1} parent=1 // pred_check
      _
    $region59: #{rnn_forward_sequence.1} parent=1 // pred_check_branch
      %2075 = sbr.rel (0) target = $region61
    $region60: #{rnn_forward_sequence.1} parent=1 // pred_region
      _
    $region61: #{rnn_forward_sequence.1} parent=1 // pred_fallthru
      _
    // Predicated region
    $region62: #{rnn_forward_sequence.1} parent=1 // pred_check
      _
    $region63: #{rnn_forward_sequence.1} parent=1 // pred_check_branch
      %2077 = sbr.rel (0) target = $region65
    $region64: #{rnn_forward_sequence.1} parent=1 // pred_region
      _
    $region65: #{rnn_forward_sequence.1} parent=1 // pred_fallthru
      _
    %2078 = vsyncpa [#allocation4], 1
    %2079 = vsyncpa [#allocation6], 1

</llo_original>
